<compile_context>
chip_gen: v6e
topology: v6e:2x2x1
jax: 0.10.0
libtpu: 0.0.40
codegen_flags: <defaults>
</compile_context>

<pallas_src>
import jax
import jax.numpy as jnp
from jax.experimental import pallas as pl
from jax.experimental.pallas import tpu as pltpu

LN_EPS = 1e-5


def ffnet_kernel(x_ref, w1_ref, b1_ref, w2_ref, b2_ref, g_ref, beta_ref,
                 o_ref, acc_ref, xb_ref):
    f = pl.program_id(1)

    @pl.when(f == 0)
    def _init():
        acc_ref[...] = jnp.zeros_like(acc_ref)
        # Cast the resident x row-tile to the matmul dtype once per row tile.
        xb_ref[...] = x_ref[...].astype(xb_ref.dtype)

    # layer1 slice: (tm, D) @ (D, tf) -> (tm, tf); bf16 MXU, f32 accumulate.
    h = jnp.dot(xb_ref[...], w1_ref[...], preferred_element_type=jnp.float32)
    h = jnp.maximum(h + b1_ref[...], 0.0)                 # bias + ReLU in f32

    # layer2 partial: (tm, tf) @ (tf, D) accumulated into f32 (tm, D) scratch.
    acc_ref[...] += jnp.dot(h.astype(w2_ref.dtype), w2_ref[...],
                            preferred_element_type=jnp.float32)

    @pl.when(f == pl.num_programs(1) - 1)
    def _epilogue():
        # TODO(synk): dropout is identity (inference); training-mode masking not implemented.
        y = acc_ref[...] + b2_ref[...] + x_ref[...].astype(jnp.float32)  # residual
        mean = jnp.mean(y, axis=-1, keepdims=True)
        centered = y - mean
        var = jnp.mean(centered * centered, axis=-1, keepdims=True)
        y_norm = centered * jax.lax.rsqrt(var + LN_EPS)
        o_ref[...] = (y_norm * g_ref[...] + beta_ref[...]).astype(o_ref.dtype)


def _round_up(x, m):
    return ((x + m - 1) // m) * m


def _vmem_need_bytes(tm, tf, D, x_isz, out_isz, mm_isz):
    """Double-buffered pipeline tiles + persistent scratch, in bytes."""
    tiles = (tm * D * x_isz        # x rows
             + D * tf * mm_isz     # W1^T column slice
             + tf * 4              # b1 slice
             + tf * D * mm_isz     # W2^T row slice
             + 3 * D * 4           # b2, gamma, beta
             + tm * D * out_isz)   # output tile
    scratch = tm * D * 4 + tm * D * mm_isz   # f32 accumulator + bf16 x copy
    return 2 * tiles + scratch


def _pick_ff_tile(F, D, tm, x_isz, out_isz, mm_isz, budget):
    """Largest tf (multiple of 128 dividing F, or F itself) fitting the budget."""
    cands = sorted({F} | {t for t in range(128, F, 128) if F % t == 0},
                   reverse=True)
    for tf in cands:
        if _vmem_need_bytes(tm, tf, D, x_isz, out_isz, mm_isz) <= budget:
            return tf
    return cands[-1]


def ffnet_forward(x, w1, b1, w2, b2, gamma, beta, *,
                  row_tile=256, ff_tile=None, matmul_dtype=jnp.bfloat16,
                  vmem_budget_bytes=40 << 20):
    """x: (B, S, D). w1: (F, D), b1: (F,), w2: (D, F), b2: (D,), gamma/beta: (D,)."""
    B, S, D = x.shape
    F = w1.shape[0]
    N = B * S

    x_isz = jnp.dtype(x.dtype).itemsize
    mm_isz = jnp.dtype(matmul_dtype).itemsize

    # Row tiling: tm is a multiple of 8; pad N up to a multiple of tm.
    tm = min(_round_up(row_tile, 8), _round_up(N, 8))
    N_pad = _round_up(N, tm)

    # F tiling: explicit ff_tile if valid, otherwise auto-size against VMEM.
    if ff_tile is not None and F % ff_tile == 0 and (ff_tile % 128 == 0 or ff_tile == F):
        tf = ff_tile
    else:
        tf = _pick_ff_tile(F, D, tm, x_isz, x_isz, mm_isz, vmem_budget_bytes)

    x2d = x.reshape(N, D)
    if N_pad != N:
        x2d = jnp.pad(x2d, ((0, N_pad - N), (0, 0)))

    w1t = w1.T.astype(matmul_dtype)                 # (D, F)
    w2t = w2.T.astype(matmul_dtype)                 # (F, D)
    b1r = b1.reshape(1, F).astype(jnp.float32)
    b2r = b2.reshape(1, D).astype(jnp.float32)
    g_r = gamma.reshape(1, D).astype(jnp.float32)
    be_r = beta.reshape(1, D).astype(jnp.float32)

    need = _vmem_need_bytes(tm, tf, D, x_isz, x_isz, mm_isz)
    vmem_limit = int(min(max(need + (8 << 20), 16 << 20), 64 << 20))

    grid = (N_pad // tm, F // tf)

    out2d = pl.pallas_call(
        ffnet_kernel,
        out_shape=jax.ShapeDtypeStruct((N_pad, D), x.dtype),
        grid=grid,
        in_specs=[
            pl.BlockSpec((tm, D), lambda i, f: (i, 0)),   # x rows (resident over f)
            pl.BlockSpec((D, tf), lambda i, f: (0, f)),   # W1^T column slice
            pl.BlockSpec((1, tf), lambda i, f: (0, f)),   # b1 slice
            pl.BlockSpec((tf, D), lambda i, f: (f, 0)),   # W2^T row slice
            pl.BlockSpec((1, D), lambda i, f: (0, 0)),    # b2
            pl.BlockSpec((1, D), lambda i, f: (0, 0)),    # LN gamma
            pl.BlockSpec((1, D), lambda i, f: (0, 0)),    # LN beta
        ],
        out_specs=pl.BlockSpec((tm, D), lambda i, f: (i, 0)),
        scratch_shapes=[pltpu.VMEM((tm, D), jnp.float32),   # f32 accumulator
                        pltpu.VMEM((tm, D), matmul_dtype)], # bf16 x copy
        compiler_params=pltpu.CompilerParams(
            dimension_semantics=("parallel", "arbitrary"),
            vmem_limit_bytes=vmem_limit),
    )(x2d, w1t, b1r, w2t, b2r, g_r, be_r)

    return out2d[:N].reshape(B, S, D)


def ffnet_reference(x, w1, b1, w2, b2, gamma, beta, matmul_dtype=jnp.bfloat16):
    """Pure-JAX reference mirroring the PyTorch forward (dropout = identity),
    using the same bf16-operand / f32-accumulate matmuls as the kernel."""
    h = jnp.einsum("bsd,fd->bsf", x.astype(matmul_dtype), w1.astype(matmul_dtype),
                   preferred_element_type=jnp.float32) + b1
    h = jnp.maximum(h, 0.0)
    y = jnp.einsum("bsf,df->bsd", h.astype(matmul_dtype), w2.astype(matmul_dtype),
                   preferred_element_type=jnp.float32) + b2
    y = y + x.astype(jnp.float32)
    mean = jnp.mean(y, axis=-1, keepdims=True)
    var = jnp.mean((y - mean) ** 2, axis=-1, keepdims=True)
    out = (y - mean) / jnp.sqrt(var + LN_EPS) * gamma + beta
    return out.astype(x.dtype)


if __name__ == "__main__":
    # Small shapes consistent with the module: x is (batch, seq, model_dim).
    # D, F kept multiples of 128 (lane-dense); N = B*S deliberately not a
    # multiple of the smaller row tile to exercise the padding path.
    B, S, D, F = 2, 100, 128, 256

    key = jax.random.PRNGKey(0)
    kx, k1, kb1, k2, kb2 = jax.random.split(key, 5)

    x = jax.random.normal(kx, (B, S, D), dtype=jnp.float32)
    w1 = jax.random.normal(k1, (F, D), dtype=jnp.float32) * (1.0 / jnp.sqrt(D))
    b1 = jax.random.normal(kb1, (F,), dtype=jnp.float32) * 0.01
    w2 = jax.random.normal(k2, (D, F), dtype=jnp.float32) * (1.0 / jnp.sqrt(F))
    b2 = jax.random.normal(kb2, (D,), dtype=jnp.float32) * 0.01
    gamma = jnp.ones((D,), dtype=jnp.float32)   # nn.LayerNorm default weight
    beta = jnp.zeros((D,), dtype=jnp.float32)   # nn.LayerNorm default bias

    ref = ffnet_reference(x, w1, b1, w2, b2, gamma, beta)

    # Path 1: auto tiling -> weights fully VMEM-resident, single ff step.
    out_auto = ffnet_forward(x, w1, b1, w2, b2, gamma, beta)
    out_auto = jax.block_until_ready(out_auto)
    assert out_auto.shape == (B, S, D)
    err_auto = jnp.max(jnp.abs(out_auto - ref))
    assert jnp.allclose(out_auto, ref, atol=2e-2, rtol=2e-2), (
        f"auto-tile mismatch vs reference (max abs err {err_auto})")

    # Path 2: forced small tiles -> exercises row padding + multi-step
    # ff-dim accumulation through the f32 scratch.
    out_tiled = ffnet_forward(x, w1, b1, w2, b2, gamma, beta,
                              row_tile=64, ff_tile=128)
    out_tiled = jax.block_until_ready(out_tiled)
    err_tiled = jnp.max(jnp.abs(out_tiled - ref))
    assert jnp.allclose(out_tiled, ref, atol=2e-2, rtol=2e-2), (
        f"tiled mismatch vs reference (max abs err {err_tiled})")

    print("KERNEL_OK")
</pallas_src>

<mosaic_0001>
module attributes {stable_mosaic.version = 11 : i64} {
  func.func @ffnet_kernel(%arg0: i32, %arg1: i32, %arg2: memref<200x128xf32, #tpu.memory_space<vmem>>, %arg3: memref<128x256xbf16, #tpu.memory_space<vmem>>, %arg4: memref<1x256xf32, #tpu.memory_space<vmem>>, %arg5: memref<256x128xbf16, #tpu.memory_space<vmem>>, %arg6: memref<1x128xf32, #tpu.memory_space<vmem>>, %arg7: memref<1x128xf32, #tpu.memory_space<vmem>>, %arg8: memref<1x128xf32, #tpu.memory_space<vmem>>, %arg9: memref<200x128xf32, #tpu.memory_space<vmem>>, %arg10: memref<200x128xf32, #tpu.memory_space<vmem>>, %arg11: memref<200x128xbf16, #tpu.memory_space<vmem>>) attributes {dimension_semantics = [#tpu.dimension_semantics<parallel>, #tpu.dimension_semantics<arbitrary>], iteration_bounds = array<i64: 1, 1>, scalar_prefetch = 0 : i64, scratch_operands = 2 : i64, tpu.core_type = #tpu.core_type<tc>, window_params = [{transform_indices = @transform_0, window_bounds = array<i64: 200, 128>}, {transform_indices = @transform_1, window_bounds = array<i64: 128, 256>}, {transform_indices = @transform_2, window_bounds = array<i64: 1, 256>}, {transform_indices = @transform_3, window_bounds = array<i64: 256, 128>}, {pipeline_mode = #tpu.pipeline_mode<synchronous>, transform_indices = @transform_4, window_bounds = array<i64: 1, 128>}, {pipeline_mode = #tpu.pipeline_mode<synchronous>, transform_indices = @transform_5, window_bounds = array<i64: 1, 128>}, {pipeline_mode = #tpu.pipeline_mode<synchronous>, transform_indices = @transform_6, window_bounds = array<i64: 1, 128>}, {transform_indices = @transform_7, window_bounds = array<i64: 200, 128>}]} {
    %c0_i32 = arith.constant 0 : i32
    %0 = arith.cmpi eq, %arg1, %c0_i32 : i32
    %1 = arith.extui %0 : i1 to i32
    %c0_i32_0 = arith.constant 0 : i32
    %2 = arith.cmpi ne, %1, %c0_i32_0 : i32
    scf.if %2 {
      %cst_16 = arith.constant 0.000000e+00 : f32
      %20 = vector.broadcast %cst_16 : f32 to vector<200x128xf32>
      %c0_17 = arith.constant 0 : index
      %c0_18 = arith.constant 0 : index
      %21 = vector.load %arg10[%c0_17, %c0_18] : memref<200x128xf32, #tpu.memory_space<vmem>>, vector<200x128xf32>
      tpu.vector_store %arg10[%c0_17, %c0_18], %20 {strides = array<i32>} : memref<200x128xf32, #tpu.memory_space<vmem>>, vector<200x128xf32>,
      %c0_19 = arith.constant 0 : index
      %c0_20 = arith.constant 0 : index
      %22 = vector.load %arg2[%c0_19, %c0_20] : memref<200x128xf32, #tpu.memory_space<vmem>>, vector<200x128xf32>
      %23 = arith.truncf %22 : vector<200x128xf32> to vector<200x128xbf16>
      %c0_21 = arith.constant 0 : index
      %c0_22 = arith.constant 0 : index
      %24 = vector.load %arg11[%c0_21, %c0_22] : memref<200x128xbf16, #tpu.memory_space<vmem>>, vector<200x128xbf16>
      tpu.vector_store %arg11[%c0_21, %c0_22], %23 {strides = array<i32>} : memref<200x128xbf16, #tpu.memory_space<vmem>>, vector<200x128xbf16>,
    } else {
    }
    %c0 = arith.constant 0 : index
    %c0_1 = arith.constant 0 : index
    %3 = vector.load %arg11[%c0, %c0_1] : memref<200x128xbf16, #tpu.memory_space<vmem>>, vector<200x128xbf16>
    %c0_2 = arith.constant 0 : index
    %c0_3 = arith.constant 0 : index
    %4 = vector.load %arg3[%c0_2, %c0_3] : memref<128x256xbf16, #tpu.memory_space<vmem>>, vector<128x256xbf16>
    %cst = arith.constant dense<0.000000e+00> : vector<200x256xf32>
    %5 = tpu.matmul %3, %4, %cst {dimension_numbers = #tpu.dot_dimension_numbers<[1], [0], [0], [1], [0, 0, 1, 1], [], []>} : vector<200x128xbf16>, vector<128x256xbf16>, vector<200x256xf32> -> vector<200x256xf32>
    %c0_4 = arith.constant 0 : index
    %c0_5 = arith.constant 0 : index
    %6 = vector.load %arg4[%c0_4, %c0_5] : memref<1x256xf32, #tpu.memory_space<vmem>>, vector<1x256xf32>
    %7 = vector.broadcast %6 : vector<1x256xf32> to vector<200x256xf32>
    %8 = arith.addf %5, %7 : vector<200x256xf32>
    %cst_6 = arith.constant 0.000000e+00 : f32
    %9 = vector.broadcast %cst_6 : f32 to vector<200x256xf32>
    %10 = arith.maximumf %8, %9 : vector<200x256xf32>
    %c0_7 = arith.constant 0 : index
    %c0_8 = arith.constant 0 : index
    %11 = vector.load %arg10[%c0_7, %c0_8] : memref<200x128xf32, #tpu.memory_space<vmem>>, vector<200x128xf32>
    %12 = arith.truncf %10 : vector<200x256xf32> to vector<200x256xbf16>
    %c0_9 = arith.constant 0 : index
    %c0_10 = arith.constant 0 : index
    %13 = vector.load %arg5[%c0_9, %c0_10] : memref<256x128xbf16, #tpu.memory_space<vmem>>, vector<256x128xbf16>
    %cst_11 = arith.constant dense<0.000000e+00> : vector<200x128xf32>
    %14 = tpu.matmul %12, %13, %cst_11 {dimension_numbers = #tpu.dot_dimension_numbers<[1], [0], [0], [1], [0, 0, 1, 1], [], []>} : vector<200x256xbf16>, vector<256x128xbf16>, vector<200x128xf32> -> vector<200x128xf32>
    %15 = arith.addf %11, %14 : vector<200x128xf32>
    %c0_12 = arith.constant 0 : index
    %c0_13 = arith.constant 0 : index
    %16 = vector.load %arg10[%c0_12, %c0_13] : memref<200x128xf32, #tpu.memory_space<vmem>>, vector<200x128xf32>
    tpu.vector_store %arg10[%c0_12, %c0_13], %15 {strides = array<i32>} : memref<200x128xf32, #tpu.memory_space<vmem>>, vector<200x128xf32>,
    %c0_i32_14 = arith.constant 0 : i32
    %17 = arith.cmpi eq, %arg1, %c0_i32_14 : i32
    %18 = arith.extui %17 : i1 to i32
    %c0_i32_15 = arith.constant 0 : i32
    %19 = arith.cmpi ne, %18, %c0_i32_15 : i32
    scf.if %19 {
      %c0_16 = arith.constant 0 : index
      %c0_17 = arith.constant 0 : index
      %20 = vector.load %arg10[%c0_16, %c0_17] : memref<200x128xf32, #tpu.memory_space<vmem>>, vector<200x128xf32>
      %c0_18 = arith.constant 0 : index
      %c0_19 = arith.constant 0 : index
      %21 = vector.load %arg6[%c0_18, %c0_19] : memref<1x128xf32, #tpu.memory_space<vmem>>, vector<1x128xf32>
      %22 = vector.broadcast %21 : vector<1x128xf32> to vector<200x128xf32>
      %23 = arith.addf %20, %22 : vector<200x128xf32>
      %c0_20 = arith.constant 0 : index
      %c0_21 = arith.constant 0 : index
      %24 = vector.load %arg2[%c0_20, %c0_21] : memref<200x128xf32, #tpu.memory_space<vmem>>, vector<200x128xf32>
      %25 = arith.addf %23, %24 : vector<200x128xf32>
      %cst_22 = arith.constant dense<0.000000e+00> : vector<200xf32>
      %26 = vector.multi_reduction <add>, %25, %cst_22 [1] : vector<200x128xf32> to vector<200xf32>
      %27 = vector.shape_cast %26 : vector<200xf32> to vector<200x1xf32>
      %cst_23 = arith.constant 1.280000e+02 : f32
      %28 = vector.broadcast %cst_23 : f32 to vector<200x1xf32>
      %29 = arith.divf %27, %28 : vector<200x1xf32>
      %30 = vector.broadcast %29 : vector<200x1xf32> to vector<200x128xf32>
      %31 = arith.subf %25, %30 : vector<200x128xf32>
      %32 = arith.mulf %31, %31 : vector<200x128xf32>
      %cst_24 = arith.constant dense<0.000000e+00> : vector<200xf32>
      %33 = vector.multi_reduction <add>, %32, %cst_24 [1] : vector<200x128xf32> to vector<200xf32>
      %34 = vector.shape_cast %33 : vector<200xf32> to vector<200x1xf32>
      %cst_25 = arith.constant 1.280000e+02 : f32
      %35 = vector.broadcast %cst_25 : f32 to vector<200x1xf32>
      %36 = arith.divf %34, %35 : vector<200x1xf32>
      %cst_26 = arith.constant 9.99999974E-6 : f32
      %37 = vector.broadcast %cst_26 : f32 to vector<200x1xf32>
      %38 = arith.addf %36, %37 : vector<200x1xf32>
      %39 = math.rsqrt %38 : vector<200x1xf32>
      %40 = vector.broadcast %39 : vector<200x1xf32> to vector<200x128xf32>
      %41 = arith.mulf %31, %40 : vector<200x128xf32>
      %c0_27 = arith.constant 0 : index
      %c0_28 = arith.constant 0 : index
      %42 = vector.load %arg7[%c0_27, %c0_28] : memref<1x128xf32, #tpu.memory_space<vmem>>, vector<1x128xf32>
      %43 = vector.broadcast %42 : vector<1x128xf32> to vector<200x128xf32>
      %44 = arith.mulf %41, %43 : vector<200x128xf32>
      %c0_29 = arith.constant 0 : index
      %c0_30 = arith.constant 0 : index
      %45 = vector.load %arg8[%c0_29, %c0_30] : memref<1x128xf32, #tpu.memory_space<vmem>>, vector<1x128xf32>
      %46 = vector.broadcast %45 : vector<1x128xf32> to vector<200x128xf32>
      %47 = arith.addf %44, %46 : vector<200x128xf32>
      %c0_31 = arith.constant 0 : index
      %c0_32 = arith.constant 0 : index
      %48 = vector.load %arg9[%c0_31, %c0_32] : memref<200x128xf32, #tpu.memory_space<vmem>>, vector<200x128xf32>
      tpu.vector_store %arg9[%c0_31, %c0_32], %47 {strides = array<i32>} : memref<200x128xf32, #tpu.memory_space<vmem>>, vector<200x128xf32>,
    } else {
    }
    return
  }
  func.func @transform_0(%arg0: i32, %arg1: i32) -> (i32, i32) {
    %c0_i32 = arith.constant 0 : i32
    %c0_i32_0 = arith.constant 0 : i32
    return %arg0, %c0_i32 : i32, i32
  }
  func.func @transform_1(%arg0: i32, %arg1: i32) -> (i32, i32) {
    %c0_i32 = arith.constant 0 : i32
    %c0_i32_0 = arith.constant 0 : i32
    return %c0_i32, %arg1 : i32, i32
  }
  func.func @transform_2(%arg0: i32, %arg1: i32) -> (i32, i32) {
    %c0_i32 = arith.constant 0 : i32
    %c0_i32_0 = arith.constant 0 : i32
    return %c0_i32, %arg1 : i32, i32
  }
  func.func @transform_3(%arg0: i32, %arg1: i32) -> (i32, i32) {
    %c0_i32 = arith.constant 0 : i32
    %c0_i32_0 = arith.constant 0 : i32
    return %arg1, %c0_i32 : i32, i32
  }
  func.func @transform_4(%arg0: i32, %arg1: i32) -> (i32, i32) {
    %c0_i32 = arith.constant 0 : i32
    %c0_i32_0 = arith.constant 0 : i32
    %c0_i32_1 = arith.constant 0 : i32
    return %c0_i32, %c0_i32_0 : i32, i32
  }
  func.func @transform_5(%arg0: i32, %arg1: i32) -> (i32, i32) {
    %c0_i32 = arith.constant 0 : i32
    %c0_i32_0 = arith.constant 0 : i32
    %c0_i32_1 = arith.constant 0 : i32
    return %c0_i32, %c0_i32_0 : i32, i32
  }
  func.func @transform_6(%arg0: i32, %arg1: i32) -> (i32, i32) {
    %c0_i32 = arith.constant 0 : i32
    %c0_i32_0 = arith.constant 0 : i32
    %c0_i32_1 = arith.constant 0 : i32
    return %c0_i32, %c0_i32_0 : i32, i32
  }
  func.func @transform_7(%arg0: i32, %arg1: i32) -> (i32, i32) {
    %c0_i32 = arith.constant 0 : i32
    %c0_i32_0 = arith.constant 0 : i32
    return %arg0, %c0_i32 : i32, i32
  }
}

</mosaic_0001>

<llo_original>
// kernel: tpu_custom_call.1
$region0: #{tpu_custom_call.1}
  #allocation0 [shape = 'u32[]', space=smem, size = 0x4, offset = 0x4, fixed_abs, tag = 'smem constant byte address 0x4 - core index']
  #allocation1 [shape = 'u32[144,128]{1,0:T(1,128)}', space=vmem, size = 0x12000, scoped, tag = 'internal scratch']
  #allocation2 [shape = 'f32[200,128]{1,0:T(8,128)}', space=vmem, size = 0x19000, scoped, tag = 'scratch operand']
  #allocation3 [shape = 'bf16[200,128]{1,0:T(8,128)(2,1)}', space=vmem, size = 0xc800, scoped, tag = 'scratch operand']
  %s0 = inlined_call_operand.hbm [shape: f32[200,128], index: 0, kind: input, shape index: {}]
  %s1 = inlined_call_operand.hbm [shape: bf16[128,256], index: 1, kind: input, shape index: {}]
  %s2 = inlined_call_operand.vmem [shape: f32[1,256], index: 2, kind: input, shape index: {}]
  %s3 = inlined_call_operand.hbm [shape: bf16[256,128], index: 3, kind: input, shape index: {}]
  %s4 = inlined_call_operand.vmem [shape: f32[1,128], index: 4, kind: input, shape index: {}]
  %s5 = inlined_call_operand.vmem [shape: f32[1,128], index: 5, kind: input, shape index: {}]
  %s6 = inlined_call_operand.vmem [shape: f32[1,128], index: 6, kind: input, shape index: {}]
  %s7 = inlined_call_operand.hbm [shape: f32[200,128], index: 7, kind: output, shape index: {}]
  %s8 = sld [smem:[#allocation0]]
  $region58: #{tpu_custom_call.1} parent=0
    _
  %s10 = ssub.s32 1, %s8
  %s11 = scalar_select 0, %s10, %s8
  $region1: #{tpu_custom_call.1} parent=0
    #allocation4 [shape = 'u8[102400]{0}', space=vmem, size = 0x19000, scoped, tag = 'input window, operand 0, single buffered']
    #allocation5 [shape = 's32[1]{0}', space=sflag, size = 0x4, scoped, tag = 'scoped memory for tpu_custom_call.1']
    #allocation6 [shape = 's32[1]{0}', space=sflag, size = 0x4, scoped, tag = 'scoped memory for tpu_custom_call.1']
    #allocation7 [shape = 'u8[65536]{0}', space=vmem, size = 0x10000, scoped, tag = 'input window, operand 1, single buffered']
    #allocation8 [shape = 's32[1]{0}', space=sflag, size = 0x4, scoped, tag = 'scoped memory for tpu_custom_call.1']
    #allocation9 [shape = 'u8[65536]{0}', space=vmem, size = 0x10000, scoped, tag = 'input window, operand 3, single buffered']
    #allocation10 [shape = 'u8[102400]{0}', space=vmem, size = 0x19000, scoped, tag = 'output window, operand 0, single buffered']
    %12 = vsyncpa [#allocation5], 0
    %13 = vsyncpa [#allocation8], 0
    %14 = vsyncpa [#allocation6], 0
    // Predicated region
    $region2: #{tpu_custom_call.1} parent=1 // pred_check
      _
    $region3: #{tpu_custom_call.1} parent=1 // pred_check_branch
      %16 = sbr.rel (0) target = $region5
    $region4: #{tpu_custom_call.1} parent=1 // pred_region
      %s18 = ssub.s32 3200, 3200
      %19 = vsyncadd [#allocation5], %s18
      %s20 = sshll.u32 [#allocation4], 4
      %s21 = int_to_ptr.vmem [resolvable:$true] %s20
      %26 = dma.hbm_to_vmem [thread:$0]  %s0, 3200, %s21, [#allocation5], 128, 128, 8
    $region5: #{tpu_custom_call.1} parent=1 // pred_fallthru
      _
    // Predicated region
    $region6: #{tpu_custom_call.1} parent=1 // pred_check
      _
    $region7: #{tpu_custom_call.1} parent=1 // pred_check_branch
      %28 = sbr.rel (0) target = $region9
    $region8: #{tpu_custom_call.1} parent=1 // pred_region
      %s30 = ssub.s32 2048, 2048
      %31 = vsyncadd [#allocation8], %s30
      %s32 = sshll.u32 [#allocation7], 4
      %s33 = int_to_ptr.vmem [resolvable:$true] %s32
      %38 = dma.hbm_to_vmem [thread:$0]  %s1, 2048, %s33, [#allocation8], 128, 128, 8
    $region9: #{tpu_custom_call.1} parent=1 // pred_fallthru
      _
    // Predicated region
    $region10: #{tpu_custom_call.1} parent=1 // pred_check
      _
    $region11: #{tpu_custom_call.1} parent=1 // pred_check_branch
      %40 = sbr.rel (0) target = $region13
    $region12: #{tpu_custom_call.1} parent=1 // pred_region
      _
    $region13: #{tpu_custom_call.1} parent=1 // pred_fallthru
      _
    // Predicated region
    $region14: #{tpu_custom_call.1} parent=1 // pred_check
      _
    $region15: #{tpu_custom_call.1} parent=1 // pred_check_branch
      %42 = sbr.rel (0) target = $region17
    $region16: #{tpu_custom_call.1} parent=1 // pred_region
      %s44 = ssub.s32 2048, 2048
      %45 = vsyncadd [#allocation8], %s44
      %s46 = sshll.u32 [#allocation9], 4
      %s47 = int_to_ptr.vmem [resolvable:$true] %s46
      %52 = dma.hbm_to_vmem [thread:$0]  %s3, 2048, %s47, [#allocation8], 64, 64, 4
    $region17: #{tpu_custom_call.1} parent=1 // pred_fallthru
      _
    // Predicated region
    $region18: #{tpu_custom_call.1} parent=1 // pred_check
      _
    $region19: #{tpu_custom_call.1} parent=1 // pred_check_branch
      %54 = sbr.rel (0) target = $region21
    $region20: #{tpu_custom_call.1} parent=1 // pred_region
      _
    $region21: #{tpu_custom_call.1} parent=1 // pred_fallthru
      _
    // Predicated region
    $region22: #{tpu_custom_call.1} parent=1 // pred_check
      _
    $region23: #{tpu_custom_call.1} parent=1 // pred_check_branch
      %56 = sbr.rel (0) target = $region25
    $region24: #{tpu_custom_call.1} parent=1 // pred_region
      _
    $region25: #{tpu_custom_call.1} parent=1 // pred_fallthru
      _
    // Predicated region
    $region26: #{tpu_custom_call.1} parent=1 // pred_check
      _
    $region27: #{tpu_custom_call.1} parent=1 // pred_check_branch
      %58 = sbr.rel (0) target = $region29
    $region28: #{tpu_custom_call.1} parent=1 // pred_region
      _
    $region29: #{tpu_custom_call.1} parent=1 // pred_fallthru
      _
    // Predicated region
    $region30: #{tpu_custom_call.1} parent=1 // pred_check
      _
    $region31: #{tpu_custom_call.1} parent=1 // pred_check_branch
      %60 = sbr.rel (0) target = $region33
    $region32: #{tpu_custom_call.1} parent=1 // pred_region
      %61 = dma.done [#allocation5], 3200
    $region33: #{tpu_custom_call.1} parent=1 // pred_fallthru
      _
    // Predicated region
    $region34: #{tpu_custom_call.1} parent=1 // pred_check
      _
    $region35: #{tpu_custom_call.1} parent=1 // pred_check_branch
      %63 = sbr.rel (0) target = $region37
    $region36: #{tpu_custom_call.1} parent=1 // pred_region
      %64 = dma.done [#allocation8], 2048
    $region37: #{tpu_custom_call.1} parent=1 // pred_fallthru
      _
    // Predicated region
    $region38: #{tpu_custom_call.1} parent=1 // pred_check
      _
    $region39: #{tpu_custom_call.1} parent=1 // pred_check_branch
      %66 = sbr.rel (0) target = $region41
    $region40: #{tpu_custom_call.1} parent=1 // pred_region
      %67 = dma.done [#allocation8], 2048
    $region41: #{tpu_custom_call.1} parent=1 // pred_fallthru
      _
    %p69 = scmp.eq.s32.totalorder 0, 0
    // Predicated region
    $region42: #{tpu_custom_call.1} parent=1 // pred_check
      %p70 = pneg %p69
    $region43: #{tpu_custom_call.1} parent=1 // pred_check_branch
      %72 = sbr.rel (%p70) target = $region45
    $region44: #{tpu_custom_call.1} parent=1 // pred_region
      %73 = vst [vmem:[#allocation2] sm:$0xff] 0.0
      %74 = vst [vmem:[#allocation2 + $0x8] sm:$0xff] 0.0
      %75 = vst [vmem:[#allocation2 + $0x10] sm:$0xff] 0.0
      %76 = vst [vmem:[#allocation2 + $0x18] sm:$0xff] 0.0
      %77 = vst [vmem:[#allocation2 + $0x20] sm:$0xff] 0.0
      %78 = vst [vmem:[#allocation2 + $0x28] sm:$0xff] 0.0
      %79 = vst [vmem:[#allocation2 + $0x30] sm:$0xff] 0.0
      %80 = vst [vmem:[#allocation2 + $0x38] sm:$0xff] 0.0
      %81 = vst [vmem:[#allocation2 + $0x40] sm:$0xff] 0.0
      %82 = vst [vmem:[#allocation2 + $0x48] sm:$0xff] 0.0
      %83 = vst [vmem:[#allocation2 + $0x50] sm:$0xff] 0.0
      %84 = vst [vmem:[#allocation2 + $0x58] sm:$0xff] 0.0
      %85 = vst [vmem:[#allocation2 + $0x60] sm:$0xff] 0.0
      %86 = vst [vmem:[#allocation2 + $0x68] sm:$0xff] 0.0
      %87 = vst [vmem:[#allocation2 + $0x70] sm:$0xff] 0.0
      %88 = vst [vmem:[#allocation2 + $0x78] sm:$0xff] 0.0
      %89 = vst [vmem:[#allocation2 + $0x80] sm:$0xff] 0.0
      %90 = vst [vmem:[#allocation2 + $0x88] sm:$0xff] 0.0
      %91 = vst [vmem:[#allocation2 + $0x90] sm:$0xff] 0.0
      %92 = vst [vmem:[#allocation2 + $0x98] sm:$0xff] 0.0
      %93 = vst [vmem:[#allocation2 + $0xa0] sm:$0xff] 0.0
      %94 = vst [vmem:[#allocation2 + $0xa8] sm:$0xff] 0.0
      %95 = vst [vmem:[#allocation2 + $0xb0] sm:$0xff] 0.0
      %96 = vst [vmem:[#allocation2 + $0xb8] sm:$0xff] 0.0
      %97 = vst [vmem:[#allocation2 + $0xc0] sm:$0xff] 0.0
      %v98 = vld [vmem:[#allocation4] sm:$0xff]
      %v99 = vld [vmem:[#allocation4 + $0x8] sm:$0xff]
      %v100 = vld [vmem:[#allocation4 + $0x10] sm:$0xff]
      %v101 = vld [vmem:[#allocation4 + $0x18] sm:$0xff]
      %v102 = vld [vmem:[#allocation4 + $0x20] sm:$0xff]
      %v103 = vld [vmem:[#allocation4 + $0x28] sm:$0xff]
      %v104 = vld [vmem:[#allocation4 + $0x30] sm:$0xff]
      %v105 = vld [vmem:[#allocation4 + $0x38] sm:$0xff]
      %v106 = vld [vmem:[#allocation4 + $0x40] sm:$0xff]
      %v107 = vld [vmem:[#allocation4 + $0x48] sm:$0xff]
      %v108 = vld [vmem:[#allocation4 + $0x50] sm:$0xff]
      %v109 = vld [vmem:[#allocation4 + $0x58] sm:$0xff]
      %v110 = vld [vmem:[#allocation4 + $0x60] sm:$0xff]
      %v111 = vld [vmem:[#allocation4 + $0x68] sm:$0xff]
      %v112 = vld [vmem:[#allocation4 + $0x70] sm:$0xff]
      %v113 = vld [vmem:[#allocation4 + $0x78] sm:$0xff]
      %v114 = vld [vmem:[#allocation4 + $0x80] sm:$0xff]
      %v115 = vld [vmem:[#allocation4 + $0x88] sm:$0xff]
      %v116 = vld [vmem:[#allocation4 + $0x90] sm:$0xff]
      %v117 = vld [vmem:[#allocation4 + $0x98] sm:$0xff]
      %v118 = vld [vmem:[#allocation4 + $0xa0] sm:$0xff]
      %v119 = vld [vmem:[#allocation4 + $0xa8] sm:$0xff]
      %v120 = vld [vmem:[#allocation4 + $0xb0] sm:$0xff]
      %v121 = vld [vmem:[#allocation4 + $0xb8] sm:$0xff]
      %v122 = vld [vmem:[#allocation4 + $0xc0] sm:$0xff]
      %v123 = vpack.c.bf16 %v99, %v98
      %v124 = vpack.c.bf16 %v101, %v100
      %v125 = vpack.c.bf16 %v103, %v102
      %v126 = vpack.c.bf16 %v105, %v104
      %v127 = vpack.c.bf16 %v107, %v106
      %v128 = vpack.c.bf16 %v109, %v108
      %v129 = vpack.c.bf16 %v111, %v110
      %v130 = vpack.c.bf16 %v113, %v112
      %v131 = vpack.c.bf16 %v115, %v114
      %v132 = vpack.c.bf16 %v117, %v116
      %v133 = vpack.c.bf16 %v119, %v118
      %v134 = vpack.c.bf16 %v121, %v120
      %v135 = vpack.c.bf16 %v122, %v122
      %v149 = vunpack.c.l.b16 %v123
      %v150 = vunpack.c.h.b16 %v123
      %v151 = vunpack.c.l.b16 %v124
      %v152 = vunpack.c.h.b16 %v124
      %v153 = vunpack.c.l.b16 %v125
      %v154 = vunpack.c.h.b16 %v125
      %v155 = vunpack.c.l.b16 %v126
      %v156 = vunpack.c.h.b16 %v126
      %v157 = vunpack.c.l.b16 %v127
      %v158 = vunpack.c.h.b16 %v127
      %v159 = vunpack.c.l.b16 %v128
      %v160 = vunpack.c.h.b16 %v128
      %v161 = vunpack.c.l.b16 %v129
      %v162 = vunpack.c.h.b16 %v129
      %v163 = vunpack.c.l.b16 %v130
      %v164 = vunpack.c.h.b16 %v130
      %v165 = vunpack.c.l.b16 %v131
      %v166 = vunpack.c.h.b16 %v131
      %v167 = vunpack.c.l.b16 %v132
      %v168 = vunpack.c.h.b16 %v132
      %v169 = vunpack.c.l.b16 %v133
      %v170 = vunpack.c.h.b16 %v133
      %v171 = vunpack.c.l.b16 %v134
      %v172 = vunpack.c.h.b16 %v134
      %v173 = vunpack.c.l.b16 %v135
      %v174 = vpack.c.b16 %v149, %v149
      %v175 = vpack.c.b16 %v150, %v150
      %v176 = vpack.c.b16 %v151, %v151
      %v177 = vpack.c.b16 %v152, %v152
      %v178 = vpack.c.b16 %v153, %v153
      %v179 = vpack.c.b16 %v154, %v154
      %v180 = vpack.c.b16 %v155, %v155
      %v181 = vpack.c.b16 %v156, %v156
      %v182 = vpack.c.b16 %v157, %v157
      %v183 = vpack.c.b16 %v158, %v158
      %v184 = vpack.c.b16 %v159, %v159
      %v185 = vpack.c.b16 %v160, %v160
      %v186 = vpack.c.b16 %v161, %v161
      %v187 = vpack.c.b16 %v162, %v162
      %v188 = vpack.c.b16 %v163, %v163
      %v189 = vpack.c.b16 %v164, %v164
      %v190 = vpack.c.b16 %v165, %v165
      %v191 = vpack.c.b16 %v166, %v166
      %v192 = vpack.c.b16 %v167, %v167
      %v193 = vpack.c.b16 %v168, %v168
      %v194 = vpack.c.b16 %v169, %v169
      %v195 = vpack.c.b16 %v170, %v170
      %v196 = vpack.c.b16 %v171, %v171
      %v197 = vpack.c.b16 %v172, %v172
      %v198 = vpack.c.b16 %v173, %v173
      %224 = vst [vmem:[#allocation3] sm:$0xf] %v174
      %225 = vst [vmem:[#allocation3 + $0x4] sm:$0xf] %v175
      %226 = vst [vmem:[#allocation3 + $0x8] sm:$0xf] %v176
      %227 = vst [vmem:[#allocation3 + $0xc] sm:$0xf] %v177
      %228 = vst [vmem:[#allocation3 + $0x10] sm:$0xf] %v178
      %229 = vst [vmem:[#allocation3 + $0x14] sm:$0xf] %v179
      %230 = vst [vmem:[#allocation3 + $0x18] sm:$0xf] %v180
      %231 = vst [vmem:[#allocation3 + $0x1c] sm:$0xf] %v181
      %232 = vst [vmem:[#allocation3 + $0x20] sm:$0xf] %v182
      %233 = vst [vmem:[#allocation3 + $0x24] sm:$0xf] %v183
      %234 = vst [vmem:[#allocation3 + $0x28] sm:$0xf] %v184
      %235 = vst [vmem:[#allocation3 + $0x2c] sm:$0xf] %v185
      %236 = vst [vmem:[#allocation3 + $0x30] sm:$0xf] %v186
      %237 = vst [vmem:[#allocation3 + $0x34] sm:$0xf] %v187
      %238 = vst [vmem:[#allocation3 + $0x38] sm:$0xf] %v188
      %239 = vst [vmem:[#allocation3 + $0x3c] sm:$0xf] %v189
      %240 = vst [vmem:[#allocation3 + $0x40] sm:$0xf] %v190
      %241 = vst [vmem:[#allocation3 + $0x44] sm:$0xf] %v191
      %242 = vst [vmem:[#allocation3 + $0x48] sm:$0xf] %v192
      %243 = vst [vmem:[#allocation3 + $0x4c] sm:$0xf] %v193
      %244 = vst [vmem:[#allocation3 + $0x50] sm:$0xf] %v194
      %245 = vst [vmem:[#allocation3 + $0x54] sm:$0xf] %v195
      %246 = vst [vmem:[#allocation3 + $0x58] sm:$0xf] %v196
      %247 = vst [vmem:[#allocation3 + $0x5c] sm:$0xf] %v197
      %248 = vst [vmem:[#allocation3 + $0x60] sm:$0xf] %v198
    $region45: #{tpu_custom_call.1} parent=1 // pred_fallthru
      _
    %v249 = vld [vmem:[#allocation3] sm:$0xf]
    %v250 = vld [vmem:[#allocation3 + $0x4] sm:$0xf]
    %v251 = vld [vmem:[#allocation3 + $0x8] sm:$0xf]
    %v252 = vld [vmem:[#allocation3 + $0xc] sm:$0xf]
    %v253 = vld [vmem:[#allocation3 + $0x10] sm:$0xf]
    %v254 = vld [vmem:[#allocation3 + $0x14] sm:$0xf]
    %v255 = vld [vmem:[#allocation3 + $0x18] sm:$0xf]
    %v256 = vld [vmem:[#allocation3 + $0x1c] sm:$0xf]
    %v257 = vld [vmem:[#allocation3 + $0x20] sm:$0xf]
    %v258 = vld [vmem:[#allocation3 + $0x24] sm:$0xf]
    %v259 = vld [vmem:[#allocation3 + $0x28] sm:$0xf]
    %v260 = vld [vmem:[#allocation3 + $0x2c] sm:$0xf]
    %v261 = vld [vmem:[#allocation3 + $0x30] sm:$0xf]
    %v262 = vld [vmem:[#allocation3 + $0x34] sm:$0xf]
    %v263 = vld [vmem:[#allocation3 + $0x38] sm:$0xf]
    %v264 = vld [vmem:[#allocation3 + $0x3c] sm:$0xf]
    %v265 = vld [vmem:[#allocation3 + $0x40] sm:$0xf]
    %v266 = vld [vmem:[#allocation3 + $0x44] sm:$0xf]
    %v267 = vld [vmem:[#allocation3 + $0x48] sm:$0xf]
    %v268 = vld [vmem:[#allocation3 + $0x4c] sm:$0xf]
    %v269 = vld [vmem:[#allocation3 + $0x50] sm:$0xf]
    %v270 = vld [vmem:[#allocation3 + $0x54] sm:$0xf]
    %v271 = vld [vmem:[#allocation3 + $0x58] sm:$0xf]
    %v272 = vld [vmem:[#allocation3 + $0x5c] sm:$0xf]
    %v273 = vld [vmem:[#allocation3 + $0x60] sm:$0xf]
    %v274 = vld [vmem:[#allocation7] sm:$0xff]
    %v275 = vld [vmem:[#allocation7 + $0x8] sm:$0xff]
    %v276 = vld [vmem:[#allocation7 + $0x10] sm:$0xff]
    %v277 = vld [vmem:[#allocation7 + $0x18] sm:$0xff]
    %v278 = vld [vmem:[#allocation7 + $0x20] sm:$0xff]
    %v279 = vld [vmem:[#allocation7 + $0x28] sm:$0xff]
    %v280 = vld [vmem:[#allocation7 + $0x30] sm:$0xff]
    %v281 = vld [vmem:[#allocation7 + $0x38] sm:$0xff]
    %v282 = vld [vmem:[#allocation7 + $0x40] sm:$0xff]
    %v283 = vld [vmem:[#allocation7 + $0x48] sm:$0xff]
    %v284 = vld [vmem:[#allocation7 + $0x50] sm:$0xff]
    %v285 = vld [vmem:[#allocation7 + $0x58] sm:$0xff]
    %v286 = vld [vmem:[#allocation7 + $0x60] sm:$0xff]
    %v287 = vld [vmem:[#allocation7 + $0x68] sm:$0xff]
    %v288 = vld [vmem:[#allocation7 + $0x70] sm:$0xff]
    %v289 = vld [vmem:[#allocation7 + $0x78] sm:$0xff]
    %v290 = vld [vmem:[%s2] sm:$0x3]
    %v292 = vlaneseq
    %v293 = vshrl.u32 %v292, 7
    %v294 = vsub.s32 0, %v293
    %v295 = vrot.slane %v290, %v294
    %v296 = vlaneseq
    %v297 = vshrl.u32 %v296, 7
    %v298 = vsub.s32 1, %v297
    %v299 = vrot.slane %v290, %v298
    %v327 = vunpack.c.l.b16 %v249
    %v328 = vunpack.c.l.b16 %v250
    %v329 = vunpack.c.l.b16 %v251
    %v330 = vunpack.c.l.b16 %v252
    %v331 = vunpack.c.l.b16 %v253
    %v332 = vunpack.c.l.b16 %v254
    %v333 = vunpack.c.l.b16 %v255
    %v334 = vunpack.c.l.b16 %v256
    %v335 = vunpack.c.l.b16 %v257
    %v336 = vunpack.c.l.b16 %v258
    %v337 = vunpack.c.l.b16 %v259
    %v338 = vunpack.c.l.b16 %v260
    %v339 = vunpack.c.l.b16 %v261
    %v340 = vunpack.c.l.b16 %v262
    %v341 = vunpack.c.l.b16 %v263
    %v342 = vunpack.c.l.b16 %v264
    %v343 = vunpack.c.l.b16 %v265
    %v344 = vunpack.c.l.b16 %v266
    %v345 = vunpack.c.l.b16 %v267
    %v346 = vunpack.c.l.b16 %v268
    %v347 = vunpack.c.l.b16 %v269
    %v348 = vunpack.c.l.b16 %v270
    %v349 = vunpack.c.l.b16 %v271
    %v350 = vunpack.c.l.b16 %v272
    %v351 = vunpack.c.l.b16 %v273
    %v352 = vpack.c.b16 %v328, %v327
    %v353 = vpack.c.b16 %v330, %v329
    %v354 = vpack.c.b16 %v332, %v331
    %v355 = vpack.c.b16 %v334, %v333
    %v356 = vpack.c.b16 %v336, %v335
    %v357 = vpack.c.b16 %v338, %v337
    %v358 = vpack.c.b16 %v340, %v339
    %v359 = vpack.c.b16 %v342, %v341
    %v360 = vpack.c.b16 %v344, %v343
    %v361 = vpack.c.b16 %v346, %v345
    %v362 = vpack.c.b16 %v348, %v347
    %v363 = vpack.c.b16 %v350, %v349
    %v364 = vpack.c.b16 %v351, %v351
    %v394 = vunpack.c.l.b16 %v274
    %v395 = vunpack.c.h.b16 %v274
    %v396 = vunpack.c.l.b16 %v275
    %v397 = vunpack.c.h.b16 %v275
    %v398 = vunpack.c.l.b16 %v276
    %v399 = vunpack.c.h.b16 %v276
    %v400 = vunpack.c.l.b16 %v277
    %v401 = vunpack.c.h.b16 %v277
    %v402 = vunpack.c.l.b16 %v278
    %v403 = vunpack.c.h.b16 %v278
    %v404 = vunpack.c.l.b16 %v279
    %v405 = vunpack.c.h.b16 %v279
    %v406 = vunpack.c.l.b16 %v280
    %v407 = vunpack.c.h.b16 %v280
    %v408 = vunpack.c.l.b16 %v281
    %v409 = vunpack.c.h.b16 %v281
    %v410 = vunpack.c.l.b16 %v282
    %v411 = vunpack.c.h.b16 %v282
    %v412 = vunpack.c.l.b16 %v283
    %v413 = vunpack.c.h.b16 %v283
    %v414 = vunpack.c.l.b16 %v284
    %v415 = vunpack.c.h.b16 %v284
    %v416 = vunpack.c.l.b16 %v285
    %v417 = vunpack.c.h.b16 %v285
    %v418 = vunpack.c.l.b16 %v286
    %v419 = vunpack.c.h.b16 %v286
    %v420 = vunpack.c.l.b16 %v287
    %v421 = vunpack.c.h.b16 %v287
    %v422 = vunpack.c.l.b16 %v288
    %v423 = vunpack.c.h.b16 %v288
    %v424 = vunpack.c.l.b16 %v289
    %v425 = vunpack.c.h.b16 %v289
    %v426 = vpack.c.b16 %v396, %v394
    %v427 = vpack.c.b16 %v397, %v395
    %v428 = vpack.c.b16 %v400, %v398
    %v429 = vpack.c.b16 %v401, %v399
    %v430 = vpack.c.b16 %v404, %v402
    %v431 = vpack.c.b16 %v405, %v403
    %v432 = vpack.c.b16 %v408, %v406
    %v433 = vpack.c.b16 %v409, %v407
    %v434 = vpack.c.b16 %v412, %v410
    %v435 = vpack.c.b16 %v413, %v411
    %v436 = vpack.c.b16 %v416, %v414
    %v437 = vpack.c.b16 %v417, %v415
    %v438 = vpack.c.b16 %v420, %v418
    %v439 = vpack.c.b16 %v421, %v419
    %v440 = vpack.c.b16 %v424, %v422
    %v441 = vpack.c.b16 %v425, %v423
    %458 = vmatprep.subr.bf16.mxu0 %v441
    %459 = vmatpush1.bf16.msra.mxu0 %v440
    %460 = vmatprep.subr.bf16.mxu0 %v439
    %461 = vmatpush1.bf16.msra.mxu0 %v438
    %462 = vmatprep.subr.bf16.mxu0 %v437
    %463 = vmatpush1.bf16.msra.mxu0 %v436
    %464 = vmatprep.subr.bf16.mxu0 %v435
    %465 = vmatpush1.bf16.msra.mxu0 %v434
    %466 = vmatprep.subr.bf16.mxu0 %v433
    %467 = vmatpush1.bf16.msra.mxu0 %v432
    %468 = vmatprep.subr.bf16.mxu0 %v431
    %469 = vmatpush1.bf16.msra.mxu0 %v430
    %470 = vmatprep.subr.bf16.mxu0 %v429
    %471 = vmatpush1.bf16.msra.mxu0 %v428
    %472 = vmatprep.subr.bf16.mxu0 %v427
    %473 = vmatpush1.bf16.msra.mxu0 %v426
    %474 = vmatprep.subr.bf16.mxu0 0
    %475 = vmatpush2.bf16.msra.mxu0 0
    %476 = vmatprep.subr.bf16.mxu0 0
    %477 = vmatpush2.bf16.msra.mxu0 0
    %478 = vmatprep.subr.bf16.mxu0 0
    %479 = vmatpush2.bf16.msra.mxu0 0
    %480 = vmatprep.subr.bf16.mxu0 0
    %481 = vmatpush2.bf16.msra.mxu0 0
    %482 = vmatprep.subr.bf16.mxu0 0
    %483 = vmatpush2.bf16.msra.mxu0 0
    %484 = vmatprep.subr.bf16.mxu0 0
    %485 = vmatpush2.bf16.msra.mxu0 0
    %486 = vmatprep.subr.bf16.mxu0 0
    %487 = vmatpush2.bf16.msra.mxu0 0
    %488 = vmatprep.subr.bf16.mxu0 0
    %489 = vmatpush2.bf16.msra.mxu0 0
    %490 = vmatprep.mubr.bf16.mxu0 0
    %491 = vmatmul.mubr.bf16.gmra.mxu0 %v352
    %v492 = vpop.f32.mrf.mxu0
    %v493 = vadd.f32 %v295, %v492
    %v494 = vpop.f32.mrf.mxu0
    %v495 = vadd.f32 %v299, %v494
    %v496 = vpop.f32.mrf.mxu0
    %v497 = vadd.f32 %v295, %v496
    %v498 = vpop.f32.mrf.mxu0
    %v499 = vadd.f32 %v299, %v498
    %500 = vmatprep.mubr.bf16.mxu0 0
    %501 = vmatmul.mubr.bf16.gmra.mxu0 %v353
    %v502 = vpop.f32.mrf.mxu0
    %v503 = vadd.f32 %v295, %v502
    %v504 = vpop.f32.mrf.mxu0
    %v505 = vadd.f32 %v299, %v504
    %v506 = vpop.f32.mrf.mxu0
    %v507 = vadd.f32 %v295, %v506
    %v508 = vpop.f32.mrf.mxu0
    %v509 = vadd.f32 %v299, %v508
    %510 = vmatprep.mubr.bf16.mxu0 0
    %511 = vmatmul.mubr.bf16.gmra.mxu0 %v354
    %v512 = vpop.f32.mrf.mxu0
    %v513 = vadd.f32 %v295, %v512
    %v514 = vpop.f32.mrf.mxu0
    %v515 = vadd.f32 %v299, %v514
    %v516 = vpop.f32.mrf.mxu0
    %v517 = vadd.f32 %v295, %v516
    %v518 = vpop.f32.mrf.mxu0
    %v519 = vadd.f32 %v299, %v518
    %520 = vmatprep.mubr.bf16.mxu0 0
    %521 = vmatmul.mubr.bf16.gmra.mxu0 %v355
    %v522 = vpop.f32.mrf.mxu0
    %v523 = vadd.f32 %v295, %v522
    %v524 = vpop.f32.mrf.mxu0
    %v525 = vadd.f32 %v299, %v524
    %v526 = vpop.f32.mrf.mxu0
    %v527 = vadd.f32 %v295, %v526
    %v528 = vpop.f32.mrf.mxu0
    %v529 = vadd.f32 %v299, %v528
    %530 = vmatprep.mubr.bf16.mxu0 0
    %531 = vmatmul.mubr.bf16.gmra.mxu0 %v356
    %v532 = vpop.f32.mrf.mxu0
    %v533 = vadd.f32 %v295, %v532
    %v534 = vpop.f32.mrf.mxu0
    %v535 = vadd.f32 %v299, %v534
    %v536 = vpop.f32.mrf.mxu0
    %v537 = vadd.f32 %v295, %v536
    %v538 = vpop.f32.mrf.mxu0
    %v539 = vadd.f32 %v299, %v538
    %540 = vmatprep.mubr.bf16.mxu0 0
    %541 = vmatmul.mubr.bf16.gmra.mxu0 %v357
    %v542 = vpop.f32.mrf.mxu0
    %v543 = vadd.f32 %v295, %v542
    %v544 = vpop.f32.mrf.mxu0
    %v545 = vadd.f32 %v299, %v544
    %v546 = vpop.f32.mrf.mxu0
    %v547 = vadd.f32 %v295, %v546
    %v548 = vpop.f32.mrf.mxu0
    %v549 = vadd.f32 %v299, %v548
    %550 = vmatprep.mubr.bf16.mxu0 0
    %551 = vmatmul.mubr.bf16.gmra.mxu0 %v358
    %v552 = vpop.f32.mrf.mxu0
    %v553 = vadd.f32 %v295, %v552
    %v554 = vpop.f32.mrf.mxu0
    %v555 = vadd.f32 %v299, %v554
    %v556 = vpop.f32.mrf.mxu0
    %v557 = vadd.f32 %v295, %v556
    %v558 = vpop.f32.mrf.mxu0
    %v559 = vadd.f32 %v299, %v558
    %560 = vmatprep.mubr.bf16.mxu0 0
    %561 = vmatmul.mubr.bf16.gmra.mxu0 %v359
    %v562 = vpop.f32.mrf.mxu0
    %v563 = vadd.f32 %v295, %v562
    %v564 = vpop.f32.mrf.mxu0
    %v565 = vadd.f32 %v299, %v564
    %v566 = vpop.f32.mrf.mxu0
    %v567 = vadd.f32 %v295, %v566
    %v568 = vpop.f32.mrf.mxu0
    %v569 = vadd.f32 %v299, %v568
    %570 = vmatprep.mubr.bf16.mxu0 0
    %571 = vmatmul.mubr.bf16.gmra.mxu0 %v360
    %v572 = vpop.f32.mrf.mxu0
    %v573 = vadd.f32 %v295, %v572
    %v574 = vpop.f32.mrf.mxu0
    %v575 = vadd.f32 %v299, %v574
    %v576 = vpop.f32.mrf.mxu0
    %v577 = vadd.f32 %v295, %v576
    %v578 = vpop.f32.mrf.mxu0
    %v579 = vadd.f32 %v299, %v578
    %580 = vmatprep.mubr.bf16.mxu0 0
    %581 = vmatmul.mubr.bf16.gmra.mxu0 %v361
    %v582 = vpop.f32.mrf.mxu0
    %v583 = vadd.f32 %v295, %v582
    %v584 = vpop.f32.mrf.mxu0
    %v585 = vadd.f32 %v299, %v584
    %v586 = vpop.f32.mrf.mxu0
    %v587 = vadd.f32 %v295, %v586
    %v588 = vpop.f32.mrf.mxu0
    %v589 = vadd.f32 %v299, %v588
    %590 = vmatprep.mubr.bf16.mxu0 0
    %591 = vmatmul.mubr.bf16.gmra.mxu0 %v362
    %v592 = vpop.f32.mrf.mxu0
    %v593 = vadd.f32 %v295, %v592
    %v594 = vpop.f32.mrf.mxu0
    %v595 = vadd.f32 %v299, %v594
    %v596 = vpop.f32.mrf.mxu0
    %v597 = vadd.f32 %v295, %v596
    %v598 = vpop.f32.mrf.mxu0
    %v599 = vadd.f32 %v299, %v598
    %600 = vmatprep.mubr.bf16.mxu0 0
    %601 = vmatmul.mubr.bf16.gmra.mxu0 %v363
    %v602 = vpop.f32.mrf.mxu0
    %v603 = vadd.f32 %v295, %v602
    %v604 = vpop.f32.mrf.mxu0
    %v605 = vadd.f32 %v299, %v604
    %v606 = vpop.f32.mrf.mxu0
    %v607 = vadd.f32 %v295, %v606
    %v608 = vpop.f32.mrf.mxu0
    %v609 = vadd.f32 %v299, %v608
    %610 = vmatprep.mubr.bf16.mxu0 0
    %611 = vmatmul.mubr.bf16.gmra.mxu0 %v364
    %v612 = vpop.f32.mrf.mxu0
    %v613 = vadd.f32 %v295, %v612
    %v614 = vpop.f32.mrf.mxu0
    %v615 = vadd.f32 %v299, %v614
    %v616 = vpop.f32.mrf.mxu0
    %v617 = vpop.f32.mrf.mxu0
    %618 = vdwg.mxu0
    %v619 = vmax.f32 %v493, 0.0
    %v620 = vmax.f32 %v495, 0.0
    %v621 = vmax.f32 %v497, 0.0
    %v622 = vmax.f32 %v499, 0.0
    %v623 = vmax.f32 %v503, 0.0
    %v624 = vmax.f32 %v505, 0.0
    %v625 = vmax.f32 %v507, 0.0
    %v626 = vmax.f32 %v509, 0.0
    %v627 = vmax.f32 %v513, 0.0
    %v628 = vmax.f32 %v515, 0.0
    %v629 = vmax.f32 %v517, 0.0
    %v630 = vmax.f32 %v519, 0.0
    %v631 = vmax.f32 %v523, 0.0
    %v632 = vmax.f32 %v525, 0.0
    %v633 = vmax.f32 %v527, 0.0
    %v634 = vmax.f32 %v529, 0.0
    %v635 = vmax.f32 %v533, 0.0
    %v636 = vmax.f32 %v535, 0.0
    %v637 = vmax.f32 %v537, 0.0
    %v638 = vmax.f32 %v539, 0.0
    %v639 = vmax.f32 %v543, 0.0
    %v640 = vmax.f32 %v545, 0.0
    %v641 = vmax.f32 %v547, 0.0
    %v642 = vmax.f32 %v549, 0.0
    %v643 = vmax.f32 %v553, 0.0
    %v644 = vmax.f32 %v555, 0.0
    %v645 = vmax.f32 %v557, 0.0
    %v646 = vmax.f32 %v559, 0.0
    %v647 = vmax.f32 %v563, 0.0
    %v648 = vmax.f32 %v565, 0.0
    %v649 = vmax.f32 %v567, 0.0
    %v650 = vmax.f32 %v569, 0.0
    %v651 = vmax.f32 %v573, 0.0
    %v652 = vmax.f32 %v575, 0.0
    %v653 = vmax.f32 %v577, 0.0
    %v654 = vmax.f32 %v579, 0.0
    %v655 = vmax.f32 %v583, 0.0
    %v656 = vmax.f32 %v585, 0.0
    %v657 = vmax.f32 %v587, 0.0
    %v658 = vmax.f32 %v589, 0.0
    %v659 = vmax.f32 %v593, 0.0
    %v660 = vmax.f32 %v595, 0.0
    %v661 = vmax.f32 %v597, 0.0
    %v662 = vmax.f32 %v599, 0.0
    %v663 = vmax.f32 %v603, 0.0
    %v664 = vmax.f32 %v605, 0.0
    %v665 = vmax.f32 %v607, 0.0
    %v666 = vmax.f32 %v609, 0.0
    %v667 = vmax.f32 %v613, 0.0
    %v668 = vmax.f32 %v615, 0.0
    %v669 = vld [vmem:[#allocation2] sm:$0xff]
    %v670 = vld [vmem:[#allocation2 + $0x8] sm:$0xff]
    %v671 = vld [vmem:[#allocation2 + $0x10] sm:$0xff]
    %v672 = vld [vmem:[#allocation2 + $0x18] sm:$0xff]
    %v673 = vld [vmem:[#allocation2 + $0x20] sm:$0xff]
    %v674 = vld [vmem:[#allocation2 + $0x28] sm:$0xff]
    %v675 = vld [vmem:[#allocation2 + $0x30] sm:$0xff]
    %v676 = vld [vmem:[#allocation2 + $0x38] sm:$0xff]
    %v677 = vld [vmem:[#allocation2 + $0x40] sm:$0xff]
    %v678 = vld [vmem:[#allocation2 + $0x48] sm:$0xff]
    %v679 = vld [vmem:[#allocation2 + $0x50] sm:$0xff]
    %v680 = vld [vmem:[#allocation2 + $0x58] sm:$0xff]
    %v681 = vld [vmem:[#allocation2 + $0x60] sm:$0xff]
    %v682 = vld [vmem:[#allocation2 + $0x68] sm:$0xff]
    %v683 = vld [vmem:[#allocation2 + $0x70] sm:$0xff]
    %v684 = vld [vmem:[#allocation2 + $0x78] sm:$0xff]
    %v685 = vld [vmem:[#allocation2 + $0x80] sm:$0xff]
    %v686 = vld [vmem:[#allocation2 + $0x88] sm:$0xff]
    %v687 = vld [vmem:[#allocation2 + $0x90] sm:$0xff]
    %v688 = vld [vmem:[#allocation2 + $0x98] sm:$0xff]
    %v689 = vld [vmem:[#allocation2 + $0xa0] sm:$0xff]
    %v690 = vld [vmem:[#allocation2 + $0xa8] sm:$0xff]
    %v691 = vld [vmem:[#allocation2 + $0xb0] sm:$0xff]
    %v692 = vld [vmem:[#allocation2 + $0xb8] sm:$0xff]
    %v693 = vld [vmem:[#allocation2 + $0xc0] sm:$0xff]
    %v694 = vpack.c.bf16 %v621, %v619
    %v695 = vpack.c.bf16 %v622, %v620
    %v696 = vpack.c.bf16 %v625, %v623
    %v697 = vpack.c.bf16 %v626, %v624
    %v698 = vpack.c.bf16 %v629, %v627
    %v699 = vpack.c.bf16 %v630, %v628
    %v700 = vpack.c.bf16 %v633, %v631
    %v701 = vpack.c.bf16 %v634, %v632
    %v702 = vpack.c.bf16 %v637, %v635
    %v703 = vpack.c.bf16 %v638, %v636
    %v704 = vpack.c.bf16 %v641, %v639
    %v705 = vpack.c.bf16 %v642, %v640
    %v706 = vpack.c.bf16 %v645, %v643
    %v707 = vpack.c.bf16 %v646, %v644
    %v708 = vpack.c.bf16 %v649, %v647
    %v709 = vpack.c.bf16 %v650, %v648
    %v710 = vpack.c.bf16 %v653, %v651
    %v711 = vpack.c.bf16 %v654, %v652
    %v712 = vpack.c.bf16 %v657, %v655
    %v713 = vpack.c.bf16 %v658, %v656
    %v714 = vpack.c.bf16 %v661, %v659
    %v715 = vpack.c.bf16 %v662, %v660
    %v716 = vpack.c.bf16 %v665, %v663
    %v717 = vpack.c.bf16 %v666, %v664
    %v718 = vpack.c.bf16 %v667, %v667
    %v719 = vpack.c.bf16 %v668, %v668
    %v720 = vld [vmem:[#allocation9] sm:$0xf]
    %v721 = vld [vmem:[#allocation9 + $0x4] sm:$0xf]
    %v722 = vld [vmem:[#allocation9 + $0x8] sm:$0xf]
    %v723 = vld [vmem:[#allocation9 + $0xc] sm:$0xf]
    %v724 = vld [vmem:[#allocation9 + $0x10] sm:$0xf]
    %v725 = vld [vmem:[#allocation9 + $0x14] sm:$0xf]
    %v726 = vld [vmem:[#allocation9 + $0x18] sm:$0xf]
    %v727 = vld [vmem:[#allocation9 + $0x1c] sm:$0xf]
    %v728 = vld [vmem:[#allocation9 + $0x20] sm:$0xf]
    %v729 = vld [vmem:[#allocation9 + $0x24] sm:$0xf]
    %v730 = vld [vmem:[#allocation9 + $0x28] sm:$0xf]
    %v731 = vld [vmem:[#allocation9 + $0x2c] sm:$0xf]
    %v732 = vld [vmem:[#allocation9 + $0x30] sm:$0xf]
    %v733 = vld [vmem:[#allocation9 + $0x34] sm:$0xf]
    %v734 = vld [vmem:[#allocation9 + $0x38] sm:$0xf]
    %v735 = vld [vmem:[#allocation9 + $0x3c] sm:$0xf]
    %v736 = vld [vmem:[#allocation9 + $0x40] sm:$0xf]
    %v737 = vld [vmem:[#allocation9 + $0x44] sm:$0xf]
    %v738 = vld [vmem:[#allocation9 + $0x48] sm:$0xf]
    %v739 = vld [vmem:[#allocation9 + $0x4c] sm:$0xf]
    %v740 = vld [vmem:[#allocation9 + $0x50] sm:$0xf]
    %v741 = vld [vmem:[#allocation9 + $0x54] sm:$0xf]
    %v742 = vld [vmem:[#allocation9 + $0x58] sm:$0xf]
    %v743 = vld [vmem:[#allocation9 + $0x5c] sm:$0xf]
    %v744 = vld [vmem:[#allocation9 + $0x60] sm:$0xf]
    %v745 = vld [vmem:[#allocation9 + $0x64] sm:$0xf]
    %v746 = vld [vmem:[#allocation9 + $0x68] sm:$0xf]
    %v747 = vld [vmem:[#allocation9 + $0x6c] sm:$0xf]
    %v748 = vld [vmem:[#allocation9 + $0x70] sm:$0xf]
    %v749 = vld [vmem:[#allocation9 + $0x74] sm:$0xf]
    %v750 = vld [vmem:[#allocation9 + $0x78] sm:$0xf]
    %v751 = vld [vmem:[#allocation9 + $0x7c] sm:$0xf]
    %v784 = vunpack.c.l.b16 %v720
    %v785 = vunpack.c.l.b16 %v721
    %v786 = vunpack.c.l.b16 %v722
    %v787 = vunpack.c.l.b16 %v723
    %v788 = vunpack.c.l.b16 %v724
    %v789 = vunpack.c.l.b16 %v725
    %v790 = vunpack.c.l.b16 %v726
    %v791 = vunpack.c.l.b16 %v727
    %v792 = vunpack.c.l.b16 %v728
    %v793 = vunpack.c.l.b16 %v729
    %v794 = vunpack.c.l.b16 %v730
    %v795 = vunpack.c.l.b16 %v731
    %v796 = vunpack.c.l.b16 %v732
    %v797 = vunpack.c.l.b16 %v733
    %v798 = vunpack.c.l.b16 %v734
    %v799 = vunpack.c.l.b16 %v735
    %v800 = vunpack.c.l.b16 %v736
    %v801 = vunpack.c.l.b16 %v737
    %v802 = vunpack.c.l.b16 %v738
    %v803 = vunpack.c.l.b16 %v739
    %v804 = vunpack.c.l.b16 %v740
    %v805 = vunpack.c.l.b16 %v741
    %v806 = vunpack.c.l.b16 %v742
    %v807 = vunpack.c.l.b16 %v743
    %v808 = vunpack.c.l.b16 %v744
    %v809 = vunpack.c.l.b16 %v745
    %v810 = vunpack.c.l.b16 %v746
    %v811 = vunpack.c.l.b16 %v747
    %v812 = vunpack.c.l.b16 %v748
    %v813 = vunpack.c.l.b16 %v749
    %v814 = vunpack.c.l.b16 %v750
    %v815 = vunpack.c.l.b16 %v751
    %v816 = vpack.c.b16 %v785, %v784
    %v817 = vpack.c.b16 %v787, %v786
    %v818 = vpack.c.b16 %v789, %v788
    %v819 = vpack.c.b16 %v791, %v790
    %v820 = vpack.c.b16 %v793, %v792
    %v821 = vpack.c.b16 %v795, %v794
    %v822 = vpack.c.b16 %v797, %v796
    %v823 = vpack.c.b16 %v799, %v798
    %v824 = vpack.c.b16 %v801, %v800
    %v825 = vpack.c.b16 %v803, %v802
    %v826 = vpack.c.b16 %v805, %v804
    %v827 = vpack.c.b16 %v807, %v806
    %v828 = vpack.c.b16 %v809, %v808
    %v829 = vpack.c.b16 %v811, %v810
    %v830 = vpack.c.b16 %v813, %v812
    %v831 = vpack.c.b16 %v815, %v814
    %848 = vmatprep.subr.bf16.mxu0 0
    %849 = vmatpush1.bf16.msra.mxu0 %v823
    %850 = vmatprep.subr.bf16.mxu0 0
    %851 = vmatpush1.bf16.msra.mxu0 %v822
    %852 = vmatprep.subr.bf16.mxu0 0
    %853 = vmatpush1.bf16.msra.mxu0 %v821
    %854 = vmatprep.subr.bf16.mxu0 0
    %855 = vmatpush1.bf16.msra.mxu0 %v820
    %856 = vmatprep.subr.bf16.mxu0 0
    %857 = vmatpush1.bf16.msra.mxu0 %v819
    %858 = vmatprep.subr.bf16.mxu0 0
    %859 = vmatpush1.bf16.msra.mxu0 %v818
    %860 = vmatprep.subr.bf16.mxu0 0
    %861 = vmatpush1.bf16.msra.mxu0 %v817
    %862 = vmatprep.subr.bf16.mxu0 0
    %863 = vmatpush1.bf16.msra.mxu0 %v816
    %864 = vmatprep.subr.bf16.mxu0 0
    %865 = vmatpush2.bf16.msra.mxu0 %v831
    %866 = vmatprep.subr.bf16.mxu0 0
    %867 = vmatpush2.bf16.msra.mxu0 %v830
    %868 = vmatprep.subr.bf16.mxu0 0
    %869 = vmatpush2.bf16.msra.mxu0 %v829
    %870 = vmatprep.subr.bf16.mxu0 0
    %871 = vmatpush2.bf16.msra.mxu0 %v828
    %872 = vmatprep.subr.bf16.mxu0 0
    %873 = vmatpush2.bf16.msra.mxu0 %v827
    %874 = vmatprep.subr.bf16.mxu0 0
    %875 = vmatpush2.bf16.msra.mxu0 %v826
    %876 = vmatprep.subr.bf16.mxu0 0
    %877 = vmatpush2.bf16.msra.mxu0 %v825
    %878 = vmatprep.subr.bf16.mxu0 0
    %879 = vmatpush2.bf16.msra.mxu0 %v824
    %880 = vmatprep.mubr.bf16.mxu0 %v695
    %881 = vmatmul.mubr.bf16.gmra.mxu0 %v694
    %v882 = vpop.f32.mrf.mxu0
    %v883 = vadd.f32 0.0, %v882
    %v884 = vpop.f32.mrf.mxu0
    %v885 = vpop.f32.mrf.mxu0
    %v886 = vadd.f32 0.0, %v885
    %v887 = vpop.f32.mrf.mxu0
    %888 = vmatprep.mubr.bf16.mxu0 %v697
    %889 = vmatmul.mubr.bf16.gmra.mxu0 %v696
    %v890 = vpop.f32.mrf.mxu0
    %v891 = vadd.f32 0.0, %v890
    %v892 = vpop.f32.mrf.mxu0
    %v893 = vpop.f32.mrf.mxu0
    %v894 = vadd.f32 0.0, %v893
    %v895 = vpop.f32.mrf.mxu0
    %896 = vmatprep.mubr.bf16.mxu0 %v699
    %897 = vmatmul.mubr.bf16.gmra.mxu0 %v698
    %v898 = vpop.f32.mrf.mxu0
    %v899 = vadd.f32 0.0, %v898
    %v900 = vpop.f32.mrf.mxu0
    %v901 = vpop.f32.mrf.mxu0
    %v902 = vadd.f32 0.0, %v901
    %v903 = vpop.f32.mrf.mxu0
    %904 = vmatprep.mubr.bf16.mxu0 %v701
    %905 = vmatmul.mubr.bf16.gmra.mxu0 %v700
    %v906 = vpop.f32.mrf.mxu0
    %v907 = vadd.f32 0.0, %v906
    %v908 = vpop.f32.mrf.mxu0
    %v909 = vpop.f32.mrf.mxu0
    %v910 = vadd.f32 0.0, %v909
    %v911 = vpop.f32.mrf.mxu0
    %912 = vmatprep.mubr.bf16.mxu0 %v703
    %913 = vmatmul.mubr.bf16.gmra.mxu0 %v702
    %v914 = vpop.f32.mrf.mxu0
    %v915 = vadd.f32 0.0, %v914
    %v916 = vpop.f32.mrf.mxu0
    %v917 = vpop.f32.mrf.mxu0
    %v918 = vadd.f32 0.0, %v917
    %v919 = vpop.f32.mrf.mxu0
    %920 = vmatprep.mubr.bf16.mxu0 %v705
    %921 = vmatmul.mubr.bf16.gmra.mxu0 %v704
    %v922 = vpop.f32.mrf.mxu0
    %v923 = vadd.f32 0.0, %v922
    %v924 = vpop.f32.mrf.mxu0
    %v925 = vpop.f32.mrf.mxu0
    %v926 = vadd.f32 0.0, %v925
    %v927 = vpop.f32.mrf.mxu0
    %928 = vmatprep.mubr.bf16.mxu0 %v707
    %929 = vmatmul.mubr.bf16.gmra.mxu0 %v706
    %v930 = vpop.f32.mrf.mxu0
    %v931 = vadd.f32 0.0, %v930
    %v932 = vpop.f32.mrf.mxu0
    %v933 = vpop.f32.mrf.mxu0
    %v934 = vadd.f32 0.0, %v933
    %v935 = vpop.f32.mrf.mxu0
    %936 = vmatprep.mubr.bf16.mxu0 %v709
    %937 = vmatmul.mubr.bf16.gmra.mxu0 %v708
    %v938 = vpop.f32.mrf.mxu0
    %v939 = vadd.f32 0.0, %v938
    %v940 = vpop.f32.mrf.mxu0
    %v941 = vpop.f32.mrf.mxu0
    %v942 = vadd.f32 0.0, %v941
    %v943 = vpop.f32.mrf.mxu0
    %944 = vmatprep.mubr.bf16.mxu0 %v711
    %945 = vmatmul.mubr.bf16.gmra.mxu0 %v710
    %v946 = vpop.f32.mrf.mxu0
    %v947 = vadd.f32 0.0, %v946
    %v948 = vpop.f32.mrf.mxu0
    %v949 = vpop.f32.mrf.mxu0
    %v950 = vadd.f32 0.0, %v949
    %v951 = vpop.f32.mrf.mxu0
    %952 = vmatprep.mubr.bf16.mxu0 %v713
    %953 = vmatmul.mubr.bf16.gmra.mxu0 %v712
    %v954 = vpop.f32.mrf.mxu0
    %v955 = vadd.f32 0.0, %v954
    %v956 = vpop.f32.mrf.mxu0
    %v957 = vpop.f32.mrf.mxu0
    %v958 = vadd.f32 0.0, %v957
    %v959 = vpop.f32.mrf.mxu0
    %960 = vmatprep.mubr.bf16.mxu0 %v715
    %961 = vmatmul.mubr.bf16.gmra.mxu0 %v714
    %v962 = vpop.f32.mrf.mxu0
    %v963 = vadd.f32 0.0, %v962
    %v964 = vpop.f32.mrf.mxu0
    %v965 = vpop.f32.mrf.mxu0
    %v966 = vadd.f32 0.0, %v965
    %v967 = vpop.f32.mrf.mxu0
    %968 = vmatprep.mubr.bf16.mxu0 %v717
    %969 = vmatmul.mubr.bf16.gmra.mxu0 %v716
    %v970 = vpop.f32.mrf.mxu0
    %v971 = vadd.f32 0.0, %v970
    %v972 = vpop.f32.mrf.mxu0
    %v973 = vpop.f32.mrf.mxu0
    %v974 = vadd.f32 0.0, %v973
    %v975 = vpop.f32.mrf.mxu0
    %976 = vmatprep.mubr.bf16.mxu0 %v719
    %977 = vmatmul.mubr.bf16.gmra.mxu0 %v718
    %v978 = vpop.f32.mrf.mxu0
    %v979 = vadd.f32 0.0, %v978
    %v980 = vpop.f32.mrf.mxu0
    %v981 = vpop.f32.mrf.mxu0
    %v982 = vpop.f32.mrf.mxu0
    %983 = vdwg.mxu0
    %v984 = vadd.f32 %v669, %v883
    %v985 = vadd.f32 %v670, %v886
    %v986 = vadd.f32 %v671, %v891
    %v987 = vadd.f32 %v672, %v894
    %v988 = vadd.f32 %v673, %v899
    %v989 = vadd.f32 %v674, %v902
    %v990 = vadd.f32 %v675, %v907
    %v991 = vadd.f32 %v676, %v910
    %v992 = vadd.f32 %v677, %v915
    %v993 = vadd.f32 %v678, %v918
    %v994 = vadd.f32 %v679, %v923
    %v995 = vadd.f32 %v680, %v926
    %v996 = vadd.f32 %v681, %v931
    %v997 = vadd.f32 %v682, %v934
    %v998 = vadd.f32 %v683, %v939
    %v999 = vadd.f32 %v684, %v942
    %v1000 = vadd.f32 %v685, %v947
    %v1001 = vadd.f32 %v686, %v950
    %v1002 = vadd.f32 %v687, %v955
    %v1003 = vadd.f32 %v688, %v958
    %v1004 = vadd.f32 %v689, %v963
    %v1005 = vadd.f32 %v690, %v966
    %v1006 = vadd.f32 %v691, %v971
    %v1007 = vadd.f32 %v692, %v974
    %v1008 = vadd.f32 %v693, %v979
    %1009 = vst [vmem:[#allocation2] sm:$0xff] %v984
    %1010 = vst [vmem:[#allocation2 + $0x8] sm:$0xff] %v985
    %1011 = vst [vmem:[#allocation2 + $0x10] sm:$0xff] %v986
    %1012 = vst [vmem:[#allocation2 + $0x18] sm:$0xff] %v987
    %1013 = vst [vmem:[#allocation2 + $0x20] sm:$0xff] %v988
    %1014 = vst [vmem:[#allocation2 + $0x28] sm:$0xff] %v989
    %1015 = vst [vmem:[#allocation2 + $0x30] sm:$0xff] %v990
    %1016 = vst [vmem:[#allocation2 + $0x38] sm:$0xff] %v991
    %1017 = vst [vmem:[#allocation2 + $0x40] sm:$0xff] %v992
    %1018 = vst [vmem:[#allocation2 + $0x48] sm:$0xff] %v993
    %1019 = vst [vmem:[#allocation2 + $0x50] sm:$0xff] %v994
    %1020 = vst [vmem:[#allocation2 + $0x58] sm:$0xff] %v995
    %1021 = vst [vmem:[#allocation2 + $0x60] sm:$0xff] %v996
    %1022 = vst [vmem:[#allocation2 + $0x68] sm:$0xff] %v997
    %1023 = vst [vmem:[#allocation2 + $0x70] sm:$0xff] %v998
    %1024 = vst [vmem:[#allocation2 + $0x78] sm:$0xff] %v999
    %1025 = vst [vmem:[#allocation2 + $0x80] sm:$0xff] %v1000
    %1026 = vst [vmem:[#allocation2 + $0x88] sm:$0xff] %v1001
    %1027 = vst [vmem:[#allocation2 + $0x90] sm:$0xff] %v1002
    %1028 = vst [vmem:[#allocation2 + $0x98] sm:$0xff] %v1003
    %1029 = vst [vmem:[#allocation2 + $0xa0] sm:$0xff] %v1004
    %1030 = vst [vmem:[#allocation2 + $0xa8] sm:$0xff] %v1005
    %1031 = vst [vmem:[#allocation2 + $0xb0] sm:$0xff] %v1006
    %1032 = vst [vmem:[#allocation2 + $0xb8] sm:$0xff] %v1007
    %1033 = vst [vmem:[#allocation2 + $0xc0] sm:$0xff] %v1008
    // Predicated region
    $region46: #{tpu_custom_call.1} parent=1 // pred_check
      %p1034 = pneg %p69
    $region47: #{tpu_custom_call.1} parent=1 // pred_check_branch
      %1036 = sbr.rel (%p1034) target = $region49
    $region48: #{tpu_custom_call.1} parent=1 // pred_region
      %v1037 = vld [vmem:[#allocation2] sm:$0xff]
      %v1038 = vld [vmem:[#allocation2 + $0x8] sm:$0xff]
      %v1039 = vld [vmem:[#allocation2 + $0x10] sm:$0xff]
      %v1040 = vld [vmem:[#allocation2 + $0x18] sm:$0xff]
      %v1041 = vld [vmem:[#allocation2 + $0x20] sm:$0xff]
      %v1042 = vld [vmem:[#allocation2 + $0x28] sm:$0xff]
      %v1043 = vld [vmem:[#allocation2 + $0x30] sm:$0xff]
      %v1044 = vld [vmem:[#allocation2 + $0x38] sm:$0xff]
      %v1045 = vld [vmem:[#allocation2 + $0x40] sm:$0xff]
      %v1046 = vld [vmem:[#allocation2 + $0x48] sm:$0xff]
      %v1047 = vld [vmem:[#allocation2 + $0x50] sm:$0xff]
      %v1048 = vld [vmem:[#allocation2 + $0x58] sm:$0xff]
      %v1049 = vld [vmem:[#allocation2 + $0x60] sm:$0xff]
      %v1050 = vld [vmem:[#allocation2 + $0x68] sm:$0xff]
      %v1051 = vld [vmem:[#allocation2 + $0x70] sm:$0xff]
      %v1052 = vld [vmem:[#allocation2 + $0x78] sm:$0xff]
      %v1053 = vld [vmem:[#allocation2 + $0x80] sm:$0xff]
      %v1054 = vld [vmem:[#allocation2 + $0x88] sm:$0xff]
      %v1055 = vld [vmem:[#allocation2 + $0x90] sm:$0xff]
      %v1056 = vld [vmem:[#allocation2 + $0x98] sm:$0xff]
      %v1057 = vld [vmem:[#allocation2 + $0xa0] sm:$0xff]
      %v1058 = vld [vmem:[#allocation2 + $0xa8] sm:$0xff]
      %v1059 = vld [vmem:[#allocation2 + $0xb0] sm:$0xff]
      %v1060 = vld [vmem:[#allocation2 + $0xb8] sm:$0xff]
      %v1061 = vld [vmem:[#allocation2 + $0xc0] sm:$0xff]
      %v1062 = vld [vmem:[%s4] sm:$0x1]
      %v1064 = vlaneseq
      %v1065 = vshrl.u32 %v1064, 7
      %v1066 = vsub.s32 0, %v1065
      %v1067 = vrot.slane %v1062, %v1066
      %v1069 = vadd.f32 %v1037, %v1067
      %v1070 = vadd.f32 %v1038, %v1067
      %v1071 = vadd.f32 %v1039, %v1067
      %v1072 = vadd.f32 %v1040, %v1067
      %v1073 = vadd.f32 %v1041, %v1067
      %v1074 = vadd.f32 %v1042, %v1067
      %v1075 = vadd.f32 %v1043, %v1067
      %v1076 = vadd.f32 %v1044, %v1067
      %v1077 = vadd.f32 %v1045, %v1067
      %v1078 = vadd.f32 %v1046, %v1067
      %v1079 = vadd.f32 %v1047, %v1067
      %v1080 = vadd.f32 %v1048, %v1067
      %v1081 = vadd.f32 %v1049, %v1067
      %v1082 = vadd.f32 %v1050, %v1067
      %v1083 = vadd.f32 %v1051, %v1067
      %v1084 = vadd.f32 %v1052, %v1067
      %v1085 = vadd.f32 %v1053, %v1067
      %v1086 = vadd.f32 %v1054, %v1067
      %v1087 = vadd.f32 %v1055, %v1067
      %v1088 = vadd.f32 %v1056, %v1067
      %v1089 = vadd.f32 %v1057, %v1067
      %v1090 = vadd.f32 %v1058, %v1067
      %v1091 = vadd.f32 %v1059, %v1067
      %v1092 = vadd.f32 %v1060, %v1067
      %v1093 = vadd.f32 %v1061, %v1067
      %v1094 = vld [vmem:[#allocation4] sm:$0xff]
      %v1095 = vld [vmem:[#allocation4 + $0x8] sm:$0xff]
      %v1096 = vld [vmem:[#allocation4 + $0x10] sm:$0xff]
      %v1097 = vld [vmem:[#allocation4 + $0x18] sm:$0xff]
      %v1098 = vld [vmem:[#allocation4 + $0x20] sm:$0xff]
      %v1099 = vld [vmem:[#allocation4 + $0x28] sm:$0xff]
      %v1100 = vld [vmem:[#allocation4 + $0x30] sm:$0xff]
      %v1101 = vld [vmem:[#allocation4 + $0x38] sm:$0xff]
      %v1102 = vld [vmem:[#allocation4 + $0x40] sm:$0xff]
      %v1103 = vld [vmem:[#allocation4 + $0x48] sm:$0xff]
      %v1104 = vld [vmem:[#allocation4 + $0x50] sm:$0xff]
      %v1105 = vld [vmem:[#allocation4 + $0x58] sm:$0xff]
      %v1106 = vld [vmem:[#allocation4 + $0x60] sm:$0xff]
      %v1107 = vld [vmem:[#allocation4 + $0x68] sm:$0xff]
      %v1108 = vld [vmem:[#allocation4 + $0x70] sm:$0xff]
      %v1109 = vld [vmem:[#allocation4 + $0x78] sm:$0xff]
      %v1110 = vld [vmem:[#allocation4 + $0x80] sm:$0xff]
      %v1111 = vld [vmem:[#allocation4 + $0x88] sm:$0xff]
      %v1112 = vld [vmem:[#allocation4 + $0x90] sm:$0xff]
      %v1113 = vld [vmem:[#allocation4 + $0x98] sm:$0xff]
      %v1114 = vld [vmem:[#allocation4 + $0xa0] sm:$0xff]
      %v1115 = vld [vmem:[#allocation4 + $0xa8] sm:$0xff]
      %v1116 = vld [vmem:[#allocation4 + $0xb0] sm:$0xff]
      %v1117 = vld [vmem:[#allocation4 + $0xb8] sm:$0xff]
      %v1118 = vld [vmem:[#allocation4 + $0xc0] sm:$0xff]
      %v1119 = vadd.f32 %v1069, %v1094
      %v1120 = vadd.f32 %v1070, %v1095
      %v1121 = vadd.f32 %v1071, %v1096
      %v1122 = vadd.f32 %v1072, %v1097
      %v1123 = vadd.f32 %v1073, %v1098
      %v1124 = vadd.f32 %v1074, %v1099
      %v1125 = vadd.f32 %v1075, %v1100
      %v1126 = vadd.f32 %v1076, %v1101
      %v1127 = vadd.f32 %v1077, %v1102
      %v1128 = vadd.f32 %v1078, %v1103
      %v1129 = vadd.f32 %v1079, %v1104
      %v1130 = vadd.f32 %v1080, %v1105
      %v1131 = vadd.f32 %v1081, %v1106
      %v1132 = vadd.f32 %v1082, %v1107
      %v1133 = vadd.f32 %v1083, %v1108
      %v1134 = vadd.f32 %v1084, %v1109
      %v1135 = vadd.f32 %v1085, %v1110
      %v1136 = vadd.f32 %v1086, %v1111
      %v1137 = vadd.f32 %v1087, %v1112
      %v1138 = vadd.f32 %v1088, %v1113
      %v1139 = vadd.f32 %v1089, %v1114
      %v1140 = vadd.f32 %v1090, %v1115
      %v1141 = vadd.f32 %v1091, %v1116
      %v1142 = vadd.f32 %v1092, %v1117
      %v1143 = vadd.f32 %v1093, %v1118
      %1144 = vadd.xlane.f32.xlu0 %v1119
      %v1145 = vpop.xlane.xlu0 %1144
      %1146 = vadd.xlane.f32.xlu0 %v1120
      %v1147 = vpop.xlane.xlu0 %1146
      %1148 = vadd.xlane.f32.xlu0 %v1121
      %v1149 = vpop.xlane.xlu0 %1148
      %1150 = vadd.xlane.f32.xlu0 %v1122
      %v1151 = vpop.xlane.xlu0 %1150
      %1152 = vadd.xlane.f32.xlu0 %v1123
      %v1153 = vpop.xlane.xlu0 %1152
      %1154 = vadd.xlane.f32.xlu0 %v1124
      %v1155 = vpop.xlane.xlu0 %1154
      %1156 = vadd.xlane.f32.xlu0 %v1125
      %v1157 = vpop.xlane.xlu0 %1156
      %1158 = vadd.xlane.f32.xlu0 %v1126
      %v1159 = vpop.xlane.xlu0 %1158
      %1160 = vadd.xlane.f32.xlu0 %v1127
      %v1161 = vpop.xlane.xlu0 %1160
      %1162 = vadd.xlane.f32.xlu0 %v1128
      %v1163 = vpop.xlane.xlu0 %1162
      %1164 = vadd.xlane.f32.xlu0 %v1129
      %v1165 = vpop.xlane.xlu0 %1164
      %1166 = vadd.xlane.f32.xlu0 %v1130
      %v1167 = vpop.xlane.xlu0 %1166
      %1168 = vadd.xlane.f32.xlu0 %v1131
      %v1169 = vpop.xlane.xlu0 %1168
      %1170 = vadd.xlane.f32.xlu0 %v1132
      %v1171 = vpop.xlane.xlu0 %1170
      %1172 = vadd.xlane.f32.xlu0 %v1133
      %v1173 = vpop.xlane.xlu0 %1172
      %1174 = vadd.xlane.f32.xlu0 %v1134
      %v1175 = vpop.xlane.xlu0 %1174
      %1176 = vadd.xlane.f32.xlu0 %v1135
      %v1177 = vpop.xlane.xlu0 %1176
      %1178 = vadd.xlane.f32.xlu0 %v1136
      %v1179 = vpop.xlane.xlu0 %1178
      %1180 = vadd.xlane.f32.xlu0 %v1137
      %v1181 = vpop.xlane.xlu0 %1180
      %1182 = vadd.xlane.f32.xlu0 %v1138
      %v1183 = vpop.xlane.xlu0 %1182
      %1184 = vadd.xlane.f32.xlu0 %v1139
      %v1185 = vpop.xlane.xlu0 %1184
      %1186 = vadd.xlane.f32.xlu0 %v1140
      %v1187 = vpop.xlane.xlu0 %1186
      %1188 = vadd.xlane.f32.xlu0 %v1141
      %v1189 = vpop.xlane.xlu0 %1188
      %1190 = vadd.xlane.f32.xlu0 %v1142
      %v1191 = vpop.xlane.xlu0 %1190
      %1192 = vadd.xlane.f32.xlu0 %v1143
      %v1193 = vpop.xlane.xlu0 %1192
      %v1194 = vrcp.pop 128.0
      %v1195 = vmul.f32 %v1145, %v1194
      %v1196 = vmul.f32 %v1147, %v1194
      %v1197 = vmul.f32 %v1149, %v1194
      %v1198 = vmul.f32 %v1151, %v1194
      %v1199 = vmul.f32 %v1153, %v1194
      %v1200 = vmul.f32 %v1155, %v1194
      %v1201 = vmul.f32 %v1157, %v1194
      %v1202 = vmul.f32 %v1159, %v1194
      %v1203 = vmul.f32 %v1161, %v1194
      %v1204 = vmul.f32 %v1163, %v1194
      %v1205 = vmul.f32 %v1165, %v1194
      %v1206 = vmul.f32 %v1167, %v1194
      %v1207 = vmul.f32 %v1169, %v1194
      %v1208 = vmul.f32 %v1171, %v1194
      %v1209 = vmul.f32 %v1173, %v1194
      %v1210 = vmul.f32 %v1175, %v1194
      %v1211 = vmul.f32 %v1177, %v1194
      %v1212 = vmul.f32 %v1179, %v1194
      %v1213 = vmul.f32 %v1181, %v1194
      %v1214 = vmul.f32 %v1183, %v1194
      %v1215 = vmul.f32 %v1185, %v1194
      %v1216 = vmul.f32 %v1187, %v1194
      %v1217 = vmul.f32 %v1189, %v1194
      %v1218 = vmul.f32 %v1191, %v1194
      %v1219 = vmul.f32 %v1193, %v1194
      %v1220 = vsub.f32 %v1119, %v1195
      %v1221 = vsub.f32 %v1120, %v1196
      %v1222 = vsub.f32 %v1121, %v1197
      %v1223 = vsub.f32 %v1122, %v1198
      %v1224 = vsub.f32 %v1123, %v1199
      %v1225 = vsub.f32 %v1124, %v1200
      %v1226 = vsub.f32 %v1125, %v1201
      %v1227 = vsub.f32 %v1126, %v1202
      %v1228 = vsub.f32 %v1127, %v1203
      %v1229 = vsub.f32 %v1128, %v1204
      %v1230 = vsub.f32 %v1129, %v1205
      %v1231 = vsub.f32 %v1130, %v1206
      %v1232 = vsub.f32 %v1131, %v1207
      %v1233 = vsub.f32 %v1132, %v1208
      %v1234 = vsub.f32 %v1133, %v1209
      %v1235 = vsub.f32 %v1134, %v1210
      %v1236 = vsub.f32 %v1135, %v1211
      %v1237 = vsub.f32 %v1136, %v1212
      %v1238 = vsub.f32 %v1137, %v1213
      %v1239 = vsub.f32 %v1138, %v1214
      %v1240 = vsub.f32 %v1139, %v1215
      %v1241 = vsub.f32 %v1140, %v1216
      %v1242 = vsub.f32 %v1141, %v1217
      %v1243 = vsub.f32 %v1142, %v1218
      %v1244 = vsub.f32 %v1143, %v1219
      %v1245 = vmul.f32 %v1220, %v1220
      %v1246 = vmul.f32 %v1221, %v1221
      %v1247 = vmul.f32 %v1222, %v1222
      %v1248 = vmul.f32 %v1223, %v1223
      %v1249 = vmul.f32 %v1224, %v1224
      %v1250 = vmul.f32 %v1225, %v1225
      %v1251 = vmul.f32 %v1226, %v1226
      %v1252 = vmul.f32 %v1227, %v1227
      %v1253 = vmul.f32 %v1228, %v1228
      %v1254 = vmul.f32 %v1229, %v1229
      %v1255 = vmul.f32 %v1230, %v1230
      %v1256 = vmul.f32 %v1231, %v1231
      %v1257 = vmul.f32 %v1232, %v1232
      %v1258 = vmul.f32 %v1233, %v1233
      %v1259 = vmul.f32 %v1234, %v1234
      %v1260 = vmul.f32 %v1235, %v1235
      %v1261 = vmul.f32 %v1236, %v1236
      %v1262 = vmul.f32 %v1237, %v1237
      %v1263 = vmul.f32 %v1238, %v1238
      %v1264 = vmul.f32 %v1239, %v1239
      %v1265 = vmul.f32 %v1240, %v1240
      %v1266 = vmul.f32 %v1241, %v1241
      %v1267 = vmul.f32 %v1242, %v1242
      %v1268 = vmul.f32 %v1243, %v1243
      %v1269 = vmul.f32 %v1244, %v1244
      %1270 = vadd.xlane.f32.xlu0 %v1245
      %v1271 = vpop.xlane.xlu0 %1270
      %1272 = vadd.xlane.f32.xlu0 %v1246
      %v1273 = vpop.xlane.xlu0 %1272
      %1274 = vadd.xlane.f32.xlu0 %v1247
      %v1275 = vpop.xlane.xlu0 %1274
      %1276 = vadd.xlane.f32.xlu0 %v1248
      %v1277 = vpop.xlane.xlu0 %1276
      %1278 = vadd.xlane.f32.xlu0 %v1249
      %v1279 = vpop.xlane.xlu0 %1278
      %1280 = vadd.xlane.f32.xlu0 %v1250
      %v1281 = vpop.xlane.xlu0 %1280
      %1282 = vadd.xlane.f32.xlu0 %v1251
      %v1283 = vpop.xlane.xlu0 %1282
      %1284 = vadd.xlane.f32.xlu0 %v1252
      %v1285 = vpop.xlane.xlu0 %1284
      %1286 = vadd.xlane.f32.xlu0 %v1253
      %v1287 = vpop.xlane.xlu0 %1286
      %1288 = vadd.xlane.f32.xlu0 %v1254
      %v1289 = vpop.xlane.xlu0 %1288
      %1290 = vadd.xlane.f32.xlu0 %v1255
      %v1291 = vpop.xlane.xlu0 %1290
      %1292 = vadd.xlane.f32.xlu0 %v1256
      %v1293 = vpop.xlane.xlu0 %1292
      %1294 = vadd.xlane.f32.xlu0 %v1257
      %v1295 = vpop.xlane.xlu0 %1294
      %1296 = vadd.xlane.f32.xlu0 %v1258
      %v1297 = vpop.xlane.xlu0 %1296
      %1298 = vadd.xlane.f32.xlu0 %v1259
      %v1299 = vpop.xlane.xlu0 %1298
      %1300 = vadd.xlane.f32.xlu0 %v1260
      %v1301 = vpop.xlane.xlu0 %1300
      %1302 = vadd.xlane.f32.xlu0 %v1261
      %v1303 = vpop.xlane.xlu0 %1302
      %1304 = vadd.xlane.f32.xlu0 %v1262
      %v1305 = vpop.xlane.xlu0 %1304
      %1306 = vadd.xlane.f32.xlu0 %v1263
      %v1307 = vpop.xlane.xlu0 %1306
      %1308 = vadd.xlane.f32.xlu0 %v1264
      %v1309 = vpop.xlane.xlu0 %1308
      %1310 = vadd.xlane.f32.xlu0 %v1265
      %v1311 = vpop.xlane.xlu0 %1310
      %1312 = vadd.xlane.f32.xlu0 %v1266
      %v1313 = vpop.xlane.xlu0 %1312
      %1314 = vadd.xlane.f32.xlu0 %v1267
      %v1315 = vpop.xlane.xlu0 %1314
      %1316 = vadd.xlane.f32.xlu0 %v1268
      %v1317 = vpop.xlane.xlu0 %1316
      %1318 = vadd.xlane.f32.xlu0 %v1269
      %v1319 = vpop.xlane.xlu0 %1318
      %v1320 = vmul.f32 %v1271, %v1194
      %v1321 = vmul.f32 %v1273, %v1194
      %v1322 = vmul.f32 %v1275, %v1194
      %v1323 = vmul.f32 %v1277, %v1194
      %v1324 = vmul.f32 %v1279, %v1194
      %v1325 = vmul.f32 %v1281, %v1194
      %v1326 = vmul.f32 %v1283, %v1194
      %v1327 = vmul.f32 %v1285, %v1194
      %v1328 = vmul.f32 %v1287, %v1194
      %v1329 = vmul.f32 %v1289, %v1194
      %v1330 = vmul.f32 %v1291, %v1194
      %v1331 = vmul.f32 %v1293, %v1194
      %v1332 = vmul.f32 %v1295, %v1194
      %v1333 = vmul.f32 %v1297, %v1194
      %v1334 = vmul.f32 %v1299, %v1194
      %v1335 = vmul.f32 %v1301, %v1194
      %v1336 = vmul.f32 %v1303, %v1194
      %v1337 = vmul.f32 %v1305, %v1194
      %v1338 = vmul.f32 %v1307, %v1194
      %v1339 = vmul.f32 %v1309, %v1194
      %v1340 = vmul.f32 %v1311, %v1194
      %v1341 = vmul.f32 %v1313, %v1194
      %v1342 = vmul.f32 %v1315, %v1194
      %v1343 = vmul.f32 %v1317, %v1194
      %v1344 = vmul.f32 %v1319, %v1194
      %v1345 = vadd.f32 %v1320, 1e-05
      %v1346 = vadd.f32 %v1321, 1e-05
      %v1347 = vadd.f32 %v1322, 1e-05
      %v1348 = vadd.f32 %v1323, 1e-05
      %v1349 = vadd.f32 %v1324, 1e-05
      %v1350 = vadd.f32 %v1325, 1e-05
      %v1351 = vadd.f32 %v1326, 1e-05
      %v1352 = vadd.f32 %v1327, 1e-05
      %v1353 = vadd.f32 %v1328, 1e-05
      %v1354 = vadd.f32 %v1329, 1e-05
      %v1355 = vadd.f32 %v1330, 1e-05
      %v1356 = vadd.f32 %v1331, 1e-05
      %v1357 = vadd.f32 %v1332, 1e-05
      %v1358 = vadd.f32 %v1333, 1e-05
      %v1359 = vadd.f32 %v1334, 1e-05
      %v1360 = vadd.f32 %v1335, 1e-05
      %v1361 = vadd.f32 %v1336, 1e-05
      %v1362 = vadd.f32 %v1337, 1e-05
      %v1363 = vadd.f32 %v1338, 1e-05
      %v1364 = vadd.f32 %v1339, 1e-05
      %v1365 = vadd.f32 %v1340, 1e-05
      %v1366 = vadd.f32 %v1341, 1e-05
      %v1367 = vadd.f32 %v1342, 1e-05
      %v1368 = vadd.f32 %v1343, 1e-05
      %v1369 = vadd.f32 %v1344, 1e-05
      %v1370 = vrsqrt.pop %v1345
      %v1371 = vrsqrt.pop %v1346
      %v1372 = vrsqrt.pop %v1347
      %v1373 = vrsqrt.pop %v1348
      %v1374 = vrsqrt.pop %v1349
      %v1375 = vrsqrt.pop %v1350
      %v1376 = vrsqrt.pop %v1351
      %v1377 = vrsqrt.pop %v1352
      %v1378 = vrsqrt.pop %v1353
      %v1379 = vrsqrt.pop %v1354
      %v1380 = vrsqrt.pop %v1355
      %v1381 = vrsqrt.pop %v1356
      %v1382 = vrsqrt.pop %v1357
      %v1383 = vrsqrt.pop %v1358
      %v1384 = vrsqrt.pop %v1359
      %v1385 = vrsqrt.pop %v1360
      %v1386 = vrsqrt.pop %v1361
      %v1387 = vrsqrt.pop %v1362
      %v1388 = vrsqrt.pop %v1363
      %v1389 = vrsqrt.pop %v1364
      %v1390 = vrsqrt.pop %v1365
      %v1391 = vrsqrt.pop %v1366
      %v1392 = vrsqrt.pop %v1367
      %v1393 = vrsqrt.pop %v1368
      %v1394 = vrsqrt.pop %v1369
      %v1395 = vmul.f32 %v1220, %v1370
      %v1396 = vmul.f32 %v1221, %v1371
      %v1397 = vmul.f32 %v1222, %v1372
      %v1398 = vmul.f32 %v1223, %v1373
      %v1399 = vmul.f32 %v1224, %v1374
      %v1400 = vmul.f32 %v1225, %v1375
      %v1401 = vmul.f32 %v1226, %v1376
      %v1402 = vmul.f32 %v1227, %v1377
      %v1403 = vmul.f32 %v1228, %v1378
      %v1404 = vmul.f32 %v1229, %v1379
      %v1405 = vmul.f32 %v1230, %v1380
      %v1406 = vmul.f32 %v1231, %v1381
      %v1407 = vmul.f32 %v1232, %v1382
      %v1408 = vmul.f32 %v1233, %v1383
      %v1409 = vmul.f32 %v1234, %v1384
      %v1410 = vmul.f32 %v1235, %v1385
      %v1411 = vmul.f32 %v1236, %v1386
      %v1412 = vmul.f32 %v1237, %v1387
      %v1413 = vmul.f32 %v1238, %v1388
      %v1414 = vmul.f32 %v1239, %v1389
      %v1415 = vmul.f32 %v1240, %v1390
      %v1416 = vmul.f32 %v1241, %v1391
      %v1417 = vmul.f32 %v1242, %v1392
      %v1418 = vmul.f32 %v1243, %v1393
      %v1419 = vmul.f32 %v1244, %v1394
      %v1420 = vld [vmem:[%s5] sm:$0x1]
      %v1422 = vlaneseq
      %v1423 = vshrl.u32 %v1422, 7
      %v1424 = vsub.s32 0, %v1423
      %v1425 = vrot.slane %v1420, %v1424
      %v1427 = vmul.f32 %v1395, %v1425
      %v1428 = vmul.f32 %v1396, %v1425
      %v1429 = vmul.f32 %v1397, %v1425
      %v1430 = vmul.f32 %v1398, %v1425
      %v1431 = vmul.f32 %v1399, %v1425
      %v1432 = vmul.f32 %v1400, %v1425
      %v1433 = vmul.f32 %v1401, %v1425
      %v1434 = vmul.f32 %v1402, %v1425
      %v1435 = vmul.f32 %v1403, %v1425
      %v1436 = vmul.f32 %v1404, %v1425
      %v1437 = vmul.f32 %v1405, %v1425
      %v1438 = vmul.f32 %v1406, %v1425
      %v1439 = vmul.f32 %v1407, %v1425
      %v1440 = vmul.f32 %v1408, %v1425
      %v1441 = vmul.f32 %v1409, %v1425
      %v1442 = vmul.f32 %v1410, %v1425
      %v1443 = vmul.f32 %v1411, %v1425
      %v1444 = vmul.f32 %v1412, %v1425
      %v1445 = vmul.f32 %v1413, %v1425
      %v1446 = vmul.f32 %v1414, %v1425
      %v1447 = vmul.f32 %v1415, %v1425
      %v1448 = vmul.f32 %v1416, %v1425
      %v1449 = vmul.f32 %v1417, %v1425
      %v1450 = vmul.f32 %v1418, %v1425
      %v1451 = vmul.f32 %v1419, %v1425
      %v1452 = vld [vmem:[%s6] sm:$0x1]
      %v1454 = vlaneseq
      %v1455 = vshrl.u32 %v1454, 7
      %v1456 = vsub.s32 0, %v1455
      %v1457 = vrot.slane %v1452, %v1456
      %v1459 = vadd.f32 %v1427, %v1457
      %v1460 = vadd.f32 %v1428, %v1457
      %v1461 = vadd.f32 %v1429, %v1457
      %v1462 = vadd.f32 %v1430, %v1457
      %v1463 = vadd.f32 %v1431, %v1457
      %v1464 = vadd.f32 %v1432, %v1457
      %v1465 = vadd.f32 %v1433, %v1457
      %v1466 = vadd.f32 %v1434, %v1457
      %v1467 = vadd.f32 %v1435, %v1457
      %v1468 = vadd.f32 %v1436, %v1457
      %v1469 = vadd.f32 %v1437, %v1457
      %v1470 = vadd.f32 %v1438, %v1457
      %v1471 = vadd.f32 %v1439, %v1457
      %v1472 = vadd.f32 %v1440, %v1457
      %v1473 = vadd.f32 %v1441, %v1457
      %v1474 = vadd.f32 %v1442, %v1457
      %v1475 = vadd.f32 %v1443, %v1457
      %v1476 = vadd.f32 %v1444, %v1457
      %v1477 = vadd.f32 %v1445, %v1457
      %v1478 = vadd.f32 %v1446, %v1457
      %v1479 = vadd.f32 %v1447, %v1457
      %v1480 = vadd.f32 %v1448, %v1457
      %v1481 = vadd.f32 %v1449, %v1457
      %v1482 = vadd.f32 %v1450, %v1457
      %v1483 = vadd.f32 %v1451, %v1457
      %1484 = vst [vmem:[#allocation10] sm:$0xff] %v1459
      %1485 = vst [vmem:[#allocation10 + $0x8] sm:$0xff] %v1460
      %1486 = vst [vmem:[#allocation10 + $0x10] sm:$0xff] %v1461
      %1487 = vst [vmem:[#allocation10 + $0x18] sm:$0xff] %v1462
      %1488 = vst [vmem:[#allocation10 + $0x20] sm:$0xff] %v1463
      %1489 = vst [vmem:[#allocation10 + $0x28] sm:$0xff] %v1464
      %1490 = vst [vmem:[#allocation10 + $0x30] sm:$0xff] %v1465
      %1491 = vst [vmem:[#allocation10 + $0x38] sm:$0xff] %v1466
      %1492 = vst [vmem:[#allocation10 + $0x40] sm:$0xff] %v1467
      %1493 = vst [vmem:[#allocation10 + $0x48] sm:$0xff] %v1468
      %1494 = vst [vmem:[#allocation10 + $0x50] sm:$0xff] %v1469
      %1495 = vst [vmem:[#allocation10 + $0x58] sm:$0xff] %v1470
      %1496 = vst [vmem:[#allocation10 + $0x60] sm:$0xff] %v1471
      %1497 = vst [vmem:[#allocation10 + $0x68] sm:$0xff] %v1472
      %1498 = vst [vmem:[#allocation10 + $0x70] sm:$0xff] %v1473
      %1499 = vst [vmem:[#allocation10 + $0x78] sm:$0xff] %v1474
      %1500 = vst [vmem:[#allocation10 + $0x80] sm:$0xff] %v1475
      %1501 = vst [vmem:[#allocation10 + $0x88] sm:$0xff] %v1476
      %1502 = vst [vmem:[#allocation10 + $0x90] sm:$0xff] %v1477
      %1503 = vst [vmem:[#allocation10 + $0x98] sm:$0xff] %v1478
      %1504 = vst [vmem:[#allocation10 + $0xa0] sm:$0xff] %v1479
      %1505 = vst [vmem:[#allocation10 + $0xa8] sm:$0xff] %v1480
      %1506 = vst [vmem:[#allocation10 + $0xb0] sm:$0xff] %v1481
      %1507 = vst [vmem:[#allocation10 + $0xb8] sm:$0xff] %v1482
      %1508 = vst [vmem:[#allocation10 + $0xc0] sm:$0xff] %v1483
    $region49: #{tpu_custom_call.1} parent=1 // pred_fallthru
      _
    // Predicated region
    $region50: #{tpu_custom_call.1} parent=1 // pred_check
      _
    $region51: #{tpu_custom_call.1} parent=1 // pred_check_branch
      %1510 = sbr.rel (0) target = $region53
    $region52: #{tpu_custom_call.1} parent=1 // pred_region
      %s1512 = ssub.s32 3200, 3200
      %1513 = vsyncadd [#allocation6], %s1512
      %s1514 = sshll.u32 [#allocation10], 4
      %s1515 = int_to_ptr.vmem [resolvable:$true] %s1514
      %1520 = dma.vmem_to_hbm [thread:$0]  %s1515, 3200, %s7, [#allocation6], 128, 128, 8
    $region53: #{tpu_custom_call.1} parent=1 // pred_fallthru
      _
    // Predicated region
    $region54: #{tpu_custom_call.1} parent=1 // pred_check
      _
    $region55: #{tpu_custom_call.1} parent=1 // pred_check_branch
      %1522 = sbr.rel (0) target = $region57
    $region56: #{tpu_custom_call.1} parent=1 // pred_region
      %1523 = dma.done [#allocation6], 3200
    $region57: #{tpu_custom_call.1} parent=1 // pred_fallthru
      _
    %1524 = vsyncpa [#allocation5], 1
    %1525 = vsyncpa [#allocation8], 1
    %1526 = vsyncpa [#allocation6], 1

</llo_original>
